<compile_context>
chip_gen: v6e
topology: v6e:2x2x1
jax: 0.10.0
libtpu: 0.0.40
codegen_flags: <defaults>
</compile_context>

<pallas_src>
import numpy as np
import jax
import jax.numpy as jnp
from jax.experimental import pallas as pl
from jax.experimental.pallas import tpu as pltpu


# ----------------------------------------------------------------------------
# Parameter packing (one-time, tiny)
# ----------------------------------------------------------------------------
def _pack_params(params, num_kpts):
    """Repack canonical parameters into the kernel's layouts.

    conv channel j = 4*k + c (keypoint-major, reference convention) is permuted
    to row c*NK + k (channel-group-major) so that
      * the block-diagonal adjacency acts on contiguous row blocks, and
      * the node relayout needs only contiguous (NK, HW) block copies.
    GRU gate weights are concatenated along the output dim as [r | z | n].
    The prediction head is passed transposed so the epilogue emits a
    lane-dense (2, T*BS*NK) slab.
    """
    NK = num_kpts
    C = params["conv_w"].shape[0]
    wc = (params["conv_w"].T.reshape(NK, 4, C)
          .transpose(1, 0, 2).reshape(4 * NK, C))
    bc = params["conv_b"].reshape(NK, 4).T.reshape(4 * NK, 1)
    gcw = params["gc_w"]                                       # (4*HW, Hd)
    gcb = params["gc_b"].reshape(1, -1)                        # (1, Hd)
    wx = jnp.concatenate([params["gru_wx"][i] for i in range(3)], axis=1)
    wh = jnp.concatenate([params["gru_wh"][i] for i in range(3)], axis=1)
    bx = jnp.concatenate([params["gru_bx"][i] for i in range(3)], axis=1)
    bh = jnp.concatenate([params["gru_bh"][i] for i in range(3)], axis=1)
    pwt = params["pred_w"].T                                   # (2, Hd)
    pbt = params["pred_b"].reshape(2, 1)                       # (2, 1)
    return wc, bc, gcw, gcb, wx, bx, wh, bh, pwt, pbt


# ----------------------------------------------------------------------------
# Fused forward: one gridless pallas_call for the whole module
# ----------------------------------------------------------------------------
def tsemgcn_predictor_forward(x, params, adj, num_kpts, hidden_dim):
    BS, T, C, H, W = x.shape
    HW = H * W
    NK, Hd = num_kpts, hidden_dim
    BT = T * BS                  # folded (time, batch) extent, time-major
    M = BS * NK                  # GRU rows per time step
    D = 4 * HW                   # node-vector length

    wc, bc, gcw, gcb, wx, bx, wh, bh, pwt, pbt = _pack_params(params, NK)

    # One XLA transpose in the wrapper: (BS,T,C,H,W) -> (C, T*BS*HW) with
    # column = (t*BS + b)*HW + s  (time-major so per-step GRU slices are
    # contiguous sublane blocks downstream).
    xk = x.reshape(BS, T, C, HW).transpose(2, 1, 0, 3).reshape(C, BT * HW)

    # Block-diagonal adjacency (I_4 (x) adj): one matmul aggregates neighbours
    # for all 4 channel groups, all time steps, batch rows and spatial
    # positions at once, directly on the conv-output layout.
    adj_blk = jnp.kron(jnp.eye(4, dtype=adj.dtype), adj)      # (4*NK, 4*NK)

    def kernel(x_ref, wc_ref, bc_ref, adjb_ref, gcw_ref, gcb_ref,
               wx_ref, bx_ref, wh_ref, bh_ref, pwt_ref, pbt_ref,
               pred_ref, feat_ref, node_ref, gx_ref, hs_ref):
        f32 = jnp.float32

        # 1) map-to-node 1x1 conv + ReLU: ONE matmul over all (t, b, s) lanes.
        nm = jnp.dot(wc_ref[...], x_ref[...], preferred_element_type=f32)
        nm = jnp.maximum(nm + bc_ref[...], 0.0)                # (4*NK, BT*HW)

        # 2) adjacency aggregation.  adj commutes with the graph-conv weight
        #    matmul (adj @ (node @ W) == (adj @ node) @ W), so apply it first,
        #    where it is a single block-diagonal dot with no relayout.
        agg = jnp.dot(adjb_ref[...], nm, preferred_element_type=f32)

        # 3) node relayout (4*NK, BT*HW) -> (BT*NK, 4*HW).  Moving (t, b) from
        #    lanes to sublanes is inherent to conv -> graph-conv; done ONCE via
        #    static contiguous block copies into VMEM scratch (robust lowering,
        #    no multi-dim transpose).
        for c in range(4):
            agg_c = agg[c * NK:(c + 1) * NK, :]                # (NK, BT*HW)
            for bt in range(BT):
                node_ref[bt * NK:(bt + 1) * NK, c * HW:(c + 1) * HW] = (
                    agg_c[:, bt * HW:(bt + 1) * HW])

        # 4) graph-conv weight matmul, all steps at once (K = 4*HW).
        gc = jnp.dot(node_ref[...], gcw_ref[...], preferred_element_type=f32)
        gc = jnp.maximum(gc + gcb_ref[...], 0.0)               # (BT*NK, Hd)

        # 5) GRU input projection hoisted out of the recurrence (one matmul).
        gx_ref[...] = (jnp.dot(gc, wx_ref[...], preferred_element_type=f32)
                       + bx_ref[...])                          # (BT*NK, 3*Hd)

        # 6) GRU recurrence (PyTorch gate convention: r applied to the full
        #    hidden-side candidate term including its bias).  Hidden states go
        #    straight into a VMEM scratch slab -- no lists / concatenate.
        #    T is tiny in the demo so this is a static unroll; for long
        #    sequences switch to lax.fori_loop(..., unroll=True).
        wh_v, bh_v = wh_ref[...], bh_ref[...]
        h = jnp.zeros((M, Hd), f32)
        for t in range(T):
            gx = gx_ref[t * M:(t + 1) * M, :]                  # (M, 3*Hd)
            gh = jnp.dot(h, wh_v, preferred_element_type=f32) + bh_v
            r = jax.nn.sigmoid(gx[:, 0:Hd] + gh[:, 0:Hd])
            z = jax.nn.sigmoid(gx[:, Hd:2 * Hd] + gh[:, Hd:2 * Hd])
            n = jnp.tanh(gx[:, 2 * Hd:3 * Hd] + r * gh[:, 2 * Hd:3 * Hd])
            h = (1.0 - z) * n + z * h
            hs_ref[t * M:(t + 1) * M, :] = h

        # 7) epilogue: one 2-D transpose -> lane-dense (., BT*NK) output slabs,
        #    prediction head fused as ONE matmul on the full feature slab.
        hs_t = hs_ref[...].T                                   # (Hd, BT*NK)
        feat_ref[...] = hs_t
        pred_ref[...] = (jnp.dot(pwt_ref[...], hs_t,
                                 preferred_element_type=f32) + pbt_ref[...])

    pred_t, feat_t = pl.pallas_call(
        kernel,
        out_shape=(
            jax.ShapeDtypeStruct((2, BT * NK), jnp.float32),    # pred^T slab
            jax.ShapeDtypeStruct((Hd, BT * NK), jnp.float32),   # feat^T slab
        ),
        scratch_shapes=[
            pltpu.VMEM((BT * NK, D), jnp.float32),       # node matrix
            pltpu.VMEM((BT * NK, 3 * Hd), jnp.float32),  # hoisted GRU x-proj
            pltpu.VMEM((BT * NK, Hd), jnp.float32),      # GRU hidden-state slab
        ],
    )(xk, wc, bc, adj_blk, gcw, gcb, wx, bx, wh, bh, pwt, pbt)

    # Cheap wrapper-side layout restore (tiny arrays).
    pred = pred_t.T.reshape(T, BS, NK, 2).transpose(1, 0, 2, 3)
    feat = feat_t.T.reshape(T, BS, NK, Hd).transpose(1, 0, 2, 3)
    return {"pred": pred, "feat": feat, "fpred": None, "bpred": None}


# ----------------------------------------------------------------------------
# Adjacency / parameters (plain JAX glue)
# ----------------------------------------------------------------------------
def make_adjacency(num_kpts):
    """Synthetic chain skeleton + self loops, symmetrically normalized."""
    a = jnp.eye(num_kpts, dtype=jnp.float32)
    idx = jnp.arange(num_kpts - 1)
    a = a.at[idx, idx + 1].set(1.0)
    a = a.at[idx + 1, idx].set(1.0)
    deg = jnp.sum(a, axis=-1)
    d_inv_sqrt = 1.0 / jnp.sqrt(deg)
    return a * d_inv_sqrt[:, None] * d_inv_sqrt[None, :]


def init_params(key, in_channels, num_kpts, feat_size, hidden_dim):
    D = feat_size * feat_size * 4
    ks = jax.random.split(key, 8)
    s = 0.1
    return {
        "conv_w": s * jax.random.normal(ks[0], (in_channels, num_kpts * 4), jnp.float32),
        "conv_b": s * jax.random.normal(ks[1], (num_kpts * 4,), jnp.float32),
        "gc_w":   s * jax.random.normal(ks[2], (D, hidden_dim), jnp.float32),
        "gc_b":   s * jax.random.normal(ks[3], (hidden_dim,), jnp.float32),
        "gru_wx": s * jax.random.normal(ks[4], (3, hidden_dim, hidden_dim), jnp.float32),
        "gru_wh": s * jax.random.normal(ks[5], (3, hidden_dim, hidden_dim), jnp.float32),
        "gru_bx": s * jax.random.normal(ks[6], (3, 1, hidden_dim), jnp.float32),
        "gru_bh": jnp.zeros((3, 1, hidden_dim), jnp.float32),
        "pred_w": s * jax.random.normal(ks[7], (hidden_dim, 2), jnp.float32),
        "pred_b": jnp.zeros((2,), jnp.float32),
    }


# ----------------------------------------------------------------------------
# Pure-JAX reference (same math, canonical parameter convention)
# ----------------------------------------------------------------------------
def reference_forward(x, params, adj, num_kpts, hidden_dim):
    BS, T, C, H, W = x.shape
    B, HW = BS * T, H * W
    hi = jax.lax.Precision.HIGHEST
    xm = x.reshape(B, C, HW)
    y = jnp.einsum("cj,bcs->bjs", params["conv_w"], xm, precision=hi)
    y = jax.nn.relu(y + params["conv_b"][None, :, None])          # (B, NK*4, HW)
    node = y.reshape(B, num_kpts, 4 * HW)                         # d = c*HW + s
    xw = jnp.einsum("bnd,dh->bnh", node, params["gc_w"], precision=hi)
    gc = jax.nn.relu(jnp.einsum("mn,bnh->bmh", adj, xw, precision=hi)
                     + params["gc_b"][None, None, :])
    gc = gc.reshape(BS, T, num_kpts, hidden_dim)

    wx, wh = params["gru_wx"], params["gru_wh"]
    bx, bh = params["gru_bx"], params["gru_bh"]
    h = jnp.zeros((BS, num_kpts, hidden_dim), jnp.float32)
    feats = []
    for t in range(T):
        xt = gc[:, t]
        g = lambda i, inp, w_, b_: (jnp.einsum("bnh,hg->bng", inp, w_[i],
                                               precision=hi) + b_[i])
        r = jax.nn.sigmoid(g(0, xt, wx, bx) + g(0, h, wh, bh))
        z = jax.nn.sigmoid(g(1, xt, wx, bx) + g(1, h, wh, bh))
        n = jnp.tanh(g(2, xt, wx, bx) + r * g(2, h, wh, bh))
        h = (1.0 - z) * n + z * h
        feats.append(h)
    feat = jnp.stack(feats, axis=1)                               # (BS,T,NK,Hd)
    pred = jnp.einsum("btnh,hp->btnp", feat, params["pred_w"],
                      precision=hi) + params["pred_b"]
    return pred, feat


# ----------------------------------------------------------------------------
# Demo
# ----------------------------------------------------------------------------
if __name__ == "__main__":
    BS, T, C = 2, 4, 4
    FEAT_SIZE = 8                    # H = W = feat_size
    NUM_KPTS = 16                    # config.num_kpts
    HIDDEN = 32                      # config.gru_param.hidden_dim

    key = jax.random.PRNGKey(0)
    kx, kp = jax.random.split(key)
    x = jax.random.normal(kx, (BS, T, C, FEAT_SIZE, FEAT_SIZE), jnp.float32)

    params = init_params(kp, C, NUM_KPTS, FEAT_SIZE, HIDDEN)
    adj = make_adjacency(NUM_KPTS)

    fwd = jax.jit(lambda x_, p_, a_: tsemgcn_predictor_forward(
        x_, p_, a_, NUM_KPTS, HIDDEN))
    out = fwd(x, params, adj)
    jax.block_until_ready(out["pred"])
    jax.block_until_ready(out["feat"])

    assert out["pred"].shape == (BS, T, NUM_KPTS, 2)
    assert out["feat"].shape == (BS, T, NUM_KPTS, HIDDEN)
    assert out["fpred"] is None and out["bpred"] is None

    ref_pred, ref_feat = reference_forward(x, params, adj, NUM_KPTS, HIDDEN)
    np.testing.assert_allclose(np.asarray(out["pred"]), np.asarray(ref_pred),
                               rtol=2e-2, atol=1e-2)
    np.testing.assert_allclose(np.asarray(out["feat"]), np.asarray(ref_feat),
                               rtol=2e-2, atol=1e-2)

    print("KERNEL_OK")
</pallas_src>

<mosaic_0001>
module attributes {stable_mosaic.version = 11 : i64} {
  func.func @kernel(%arg0: memref<4x512xf32, #tpu.memory_space<vmem>>, %arg1: memref<64x4xf32, #tpu.memory_space<vmem>>, %arg2: memref<64x1xf32, #tpu.memory_space<vmem>>, %arg3: memref<64x64xf32, #tpu.memory_space<vmem>>, %arg4: memref<256x32xf32, #tpu.memory_space<vmem>>, %arg5: memref<1x32xf32, #tpu.memory_space<vmem>>, %arg6: memref<32x96xf32, #tpu.memory_space<vmem>>, %arg7: memref<1x96xf32, #tpu.memory_space<vmem>>, %arg8: memref<32x96xf32, #tpu.memory_space<vmem>>, %arg9: memref<1x96xf32, #tpu.memory_space<vmem>>, %arg10: memref<2x32xf32, #tpu.memory_space<vmem>>, %arg11: memref<2x1xf32, #tpu.memory_space<vmem>>, %arg12: memref<2x128xf32, #tpu.memory_space<vmem>>, %arg13: memref<32x128xf32, #tpu.memory_space<vmem>>, %arg14: memref<128x256xf32, #tpu.memory_space<vmem>>, %arg15: memref<128x96xf32, #tpu.memory_space<vmem>>, %arg16: memref<128x32xf32, #tpu.memory_space<vmem>>) attributes {dimension_semantics = [], scalar_prefetch = 0 : i64, scratch_operands = 3 : i64, tpu.core_type = #tpu.core_type<tc>} {
    %c0 = arith.constant 0 : index
    %c0_0 = arith.constant 0 : index
    %0 = vector.load %arg1[%c0, %c0_0] : memref<64x4xf32, #tpu.memory_space<vmem>>, vector<64x4xf32>
    %c0_1 = arith.constant 0 : index
    %c0_2 = arith.constant 0 : index
    %1 = vector.load %arg0[%c0_1, %c0_2] : memref<4x512xf32, #tpu.memory_space<vmem>>, vector<4x512xf32>
    %cst = arith.constant dense<0.000000e+00> : vector<64x512xf32>
    %2 = tpu.matmul %0, %1, %cst {dimension_numbers = #tpu.dot_dimension_numbers<[1], [0], [0], [1], [0, 0, 1, 1], [], []>} : vector<64x4xf32>, vector<4x512xf32>, vector<64x512xf32> -> vector<64x512xf32>
    %c0_3 = arith.constant 0 : index
    %c0_4 = arith.constant 0 : index
    %3 = vector.load %arg2[%c0_3, %c0_4] : memref<64x1xf32, #tpu.memory_space<vmem>>, vector<64x1xf32>
    %4 = vector.broadcast %3 : vector<64x1xf32> to vector<64x512xf32>
    %5 = arith.addf %2, %4 : vector<64x512xf32>
    %cst_5 = arith.constant 0.000000e+00 : f32
    %6 = vector.broadcast %cst_5 : f32 to vector<64x512xf32>
    %7 = arith.maximumf %5, %6 : vector<64x512xf32>
    %c0_6 = arith.constant 0 : index
    %c0_7 = arith.constant 0 : index
    %8 = vector.load %arg3[%c0_6, %c0_7] : memref<64x64xf32, #tpu.memory_space<vmem>>, vector<64x64xf32>
    %cst_8 = arith.constant dense<0.000000e+00> : vector<64x512xf32>
    %9 = tpu.matmul %8, %7, %cst_8 {dimension_numbers = #tpu.dot_dimension_numbers<[1], [0], [0], [1], [0, 0, 1, 1], [], []>} : vector<64x64xf32>, vector<64x512xf32>, vector<64x512xf32> -> vector<64x512xf32>
    %10 = vector.extract_strided_slice %9 {offsets = [0, 0], sizes = [16, 512], strides = [1, 1]} : vector<64x512xf32> to vector<16x512xf32>
    %11 = vector.extract_strided_slice %10 {offsets = [0, 0], sizes = [16, 64], strides = [1, 1]} : vector<16x512xf32> to vector<16x64xf32>
    %c0_9 = arith.constant 0 : index
    %c0_10 = arith.constant 0 : index
    %12 = vector.load %arg14[%c0_9, %c0_10] : memref<128x256xf32, #tpu.memory_space<vmem>>, vector<16x64xf32>
    tpu.vector_store %arg14[%c0_9, %c0_10], %11 {strides = array<i32>} : memref<128x256xf32, #tpu.memory_space<vmem>>, vector<16x64xf32>,
    %13 = vector.extract_strided_slice %10 {offsets = [0, 64], sizes = [16, 64], strides = [1, 1]} : vector<16x512xf32> to vector<16x64xf32>
    %c16 = arith.constant 16 : index
    %c0_11 = arith.constant 0 : index
    %14 = vector.load %arg14[%c16, %c0_11] : memref<128x256xf32, #tpu.memory_space<vmem>>, vector<16x64xf32>
    tpu.vector_store %arg14[%c16, %c0_11], %13 {strides = array<i32>} : memref<128x256xf32, #tpu.memory_space<vmem>>, vector<16x64xf32>,
    %15 = vector.extract_strided_slice %10 {offsets = [0, 128], sizes = [16, 64], strides = [1, 1]} : vector<16x512xf32> to vector<16x64xf32>
    %c32 = arith.constant 32 : index
    %c0_12 = arith.constant 0 : index
    %16 = vector.load %arg14[%c32, %c0_12] : memref<128x256xf32, #tpu.memory_space<vmem>>, vector<16x64xf32>
    tpu.vector_store %arg14[%c32, %c0_12], %15 {strides = array<i32>} : memref<128x256xf32, #tpu.memory_space<vmem>>, vector<16x64xf32>,
    %17 = vector.extract_strided_slice %10 {offsets = [0, 192], sizes = [16, 64], strides = [1, 1]} : vector<16x512xf32> to vector<16x64xf32>
    %c48 = arith.constant 48 : index
    %c0_13 = arith.constant 0 : index
    %18 = vector.load %arg14[%c48, %c0_13] : memref<128x256xf32, #tpu.memory_space<vmem>>, vector<16x64xf32>
    tpu.vector_store %arg14[%c48, %c0_13], %17 {strides = array<i32>} : memref<128x256xf32, #tpu.memory_space<vmem>>, vector<16x64xf32>,
    %19 = vector.extract_strided_slice %10 {offsets = [0, 256], sizes = [16, 64], strides = [1, 1]} : vector<16x512xf32> to vector<16x64xf32>
    %c64 = arith.constant 64 : index
    %c0_14 = arith.constant 0 : index
    %20 = vector.load %arg14[%c64, %c0_14] : memref<128x256xf32, #tpu.memory_space<vmem>>, vector<16x64xf32>
    tpu.vector_store %arg14[%c64, %c0_14], %19 {strides = array<i32>} : memref<128x256xf32, #tpu.memory_space<vmem>>, vector<16x64xf32>,
    %21 = vector.extract_strided_slice %10 {offsets = [0, 320], sizes = [16, 64], strides = [1, 1]} : vector<16x512xf32> to vector<16x64xf32>
    %c80 = arith.constant 80 : index
    %c0_15 = arith.constant 0 : index
    %22 = vector.load %arg14[%c80, %c0_15] : memref<128x256xf32, #tpu.memory_space<vmem>>, vector<16x64xf32>
    tpu.vector_store %arg14[%c80, %c0_15], %21 {strides = array<i32>} : memref<128x256xf32, #tpu.memory_space<vmem>>, vector<16x64xf32>,
    %23 = vector.extract_strided_slice %10 {offsets = [0, 384], sizes = [16, 64], strides = [1, 1]} : vector<16x512xf32> to vector<16x64xf32>
    %c96 = arith.constant 96 : index
    %c0_16 = arith.constant 0 : index
    %24 = vector.load %arg14[%c96, %c0_16] : memref<128x256xf32, #tpu.memory_space<vmem>>, vector<16x64xf32>
    tpu.vector_store %arg14[%c96, %c0_16], %23 {strides = array<i32>} : memref<128x256xf32, #tpu.memory_space<vmem>>, vector<16x64xf32>,
    %25 = vector.extract_strided_slice %10 {offsets = [0, 448], sizes = [16, 64], strides = [1, 1]} : vector<16x512xf32> to vector<16x64xf32>
    %c112 = arith.constant 112 : index
    %c0_17 = arith.constant 0 : index
    %26 = vector.load %arg14[%c112, %c0_17] : memref<128x256xf32, #tpu.memory_space<vmem>>, vector<16x64xf32>
    tpu.vector_store %arg14[%c112, %c0_17], %25 {strides = array<i32>} : memref<128x256xf32, #tpu.memory_space<vmem>>, vector<16x64xf32>,
    %27 = vector.extract_strided_slice %9 {offsets = [16, 0], sizes = [16, 512], strides = [1, 1]} : vector<64x512xf32> to vector<16x512xf32>
    %28 = vector.extract_strided_slice %27 {offsets = [0, 0], sizes = [16, 64], strides = [1, 1]} : vector<16x512xf32> to vector<16x64xf32>
    %c0_18 = arith.constant 0 : index
    %c64_19 = arith.constant 64 : index
    %29 = vector.load %arg14[%c0_18, %c64_19] : memref<128x256xf32, #tpu.memory_space<vmem>>, vector<16x64xf32>
    tpu.vector_store %arg14[%c0_18, %c64_19], %28 {strides = array<i32>} : memref<128x256xf32, #tpu.memory_space<vmem>>, vector<16x64xf32>,
    %30 = vector.extract_strided_slice %27 {offsets = [0, 64], sizes = [16, 64], strides = [1, 1]} : vector<16x512xf32> to vector<16x64xf32>
    %c16_20 = arith.constant 16 : index
    %c64_21 = arith.constant 64 : index
    %31 = vector.load %arg14[%c16_20, %c64_21] : memref<128x256xf32, #tpu.memory_space<vmem>>, vector<16x64xf32>
    tpu.vector_store %arg14[%c16_20, %c64_21], %30 {strides = array<i32>} : memref<128x256xf32, #tpu.memory_space<vmem>>, vector<16x64xf32>,
    %32 = vector.extract_strided_slice %27 {offsets = [0, 128], sizes = [16, 64], strides = [1, 1]} : vector<16x512xf32> to vector<16x64xf32>
    %c32_22 = arith.constant 32 : index
    %c64_23 = arith.constant 64 : index
    %33 = vector.load %arg14[%c32_22, %c64_23] : memref<128x256xf32, #tpu.memory_space<vmem>>, vector<16x64xf32>
    tpu.vector_store %arg14[%c32_22, %c64_23], %32 {strides = array<i32>} : memref<128x256xf32, #tpu.memory_space<vmem>>, vector<16x64xf32>,
    %34 = vector.extract_strided_slice %27 {offsets = [0, 192], sizes = [16, 64], strides = [1, 1]} : vector<16x512xf32> to vector<16x64xf32>
    %c48_24 = arith.constant 48 : index
    %c64_25 = arith.constant 64 : index
    %35 = vector.load %arg14[%c48_24, %c64_25] : memref<128x256xf32, #tpu.memory_space<vmem>>, vector<16x64xf32>
    tpu.vector_store %arg14[%c48_24, %c64_25], %34 {strides = array<i32>} : memref<128x256xf32, #tpu.memory_space<vmem>>, vector<16x64xf32>,
    %36 = vector.extract_strided_slice %27 {offsets = [0, 256], sizes = [16, 64], strides = [1, 1]} : vector<16x512xf32> to vector<16x64xf32>
    %c64_26 = arith.constant 64 : index
    %c64_27 = arith.constant 64 : index
    %37 = vector.load %arg14[%c64_26, %c64_27] : memref<128x256xf32, #tpu.memory_space<vmem>>, vector<16x64xf32>
    tpu.vector_store %arg14[%c64_26, %c64_27], %36 {strides = array<i32>} : memref<128x256xf32, #tpu.memory_space<vmem>>, vector<16x64xf32>,
    %38 = vector.extract_strided_slice %27 {offsets = [0, 320], sizes = [16, 64], strides = [1, 1]} : vector<16x512xf32> to vector<16x64xf32>
    %c80_28 = arith.constant 80 : index
    %c64_29 = arith.constant 64 : index
    %39 = vector.load %arg14[%c80_28, %c64_29] : memref<128x256xf32, #tpu.memory_space<vmem>>, vector<16x64xf32>
    tpu.vector_store %arg14[%c80_28, %c64_29], %38 {strides = array<i32>} : memref<128x256xf32, #tpu.memory_space<vmem>>, vector<16x64xf32>,
    %40 = vector.extract_strided_slice %27 {offsets = [0, 384], sizes = [16, 64], strides = [1, 1]} : vector<16x512xf32> to vector<16x64xf32>
    %c96_30 = arith.constant 96 : index
    %c64_31 = arith.constant 64 : index
    %41 = vector.load %arg14[%c96_30, %c64_31] : memref<128x256xf32, #tpu.memory_space<vmem>>, vector<16x64xf32>
    tpu.vector_store %arg14[%c96_30, %c64_31], %40 {strides = array<i32>} : memref<128x256xf32, #tpu.memory_space<vmem>>, vector<16x64xf32>,
    %42 = vector.extract_strided_slice %27 {offsets = [0, 448], sizes = [16, 64], strides = [1, 1]} : vector<16x512xf32> to vector<16x64xf32>
    %c112_32 = arith.constant 112 : index
    %c64_33 = arith.constant 64 : index
    %43 = vector.load %arg14[%c112_32, %c64_33] : memref<128x256xf32, #tpu.memory_space<vmem>>, vector<16x64xf32>
    tpu.vector_store %arg14[%c112_32, %c64_33], %42 {strides = array<i32>} : memref<128x256xf32, #tpu.memory_space<vmem>>, vector<16x64xf32>,
    %44 = vector.extract_strided_slice %9 {offsets = [32, 0], sizes = [16, 512], strides = [1, 1]} : vector<64x512xf32> to vector<16x512xf32>
    %45 = vector.extract_strided_slice %44 {offsets = [0, 0], sizes = [16, 64], strides = [1, 1]} : vector<16x512xf32> to vector<16x64xf32>
    %c0_34 = arith.constant 0 : index
    %c128 = arith.constant 128 : index
    %46 = vector.load %arg14[%c0_34, %c128] : memref<128x256xf32, #tpu.memory_space<vmem>>, vector<16x64xf32>
    tpu.vector_store %arg14[%c0_34, %c128], %45 {strides = array<i32>} : memref<128x256xf32, #tpu.memory_space<vmem>>, vector<16x64xf32>,
    %47 = vector.extract_strided_slice %44 {offsets = [0, 64], sizes = [16, 64], strides = [1, 1]} : vector<16x512xf32> to vector<16x64xf32>
    %c16_35 = arith.constant 16 : index
    %c128_36 = arith.constant 128 : index
    %48 = vector.load %arg14[%c16_35, %c128_36] : memref<128x256xf32, #tpu.memory_space<vmem>>, vector<16x64xf32>
    tpu.vector_store %arg14[%c16_35, %c128_36], %47 {strides = array<i32>} : memref<128x256xf32, #tpu.memory_space<vmem>>, vector<16x64xf32>,
    %49 = vector.extract_strided_slice %44 {offsets = [0, 128], sizes = [16, 64], strides = [1, 1]} : vector<16x512xf32> to vector<16x64xf32>
    %c32_37 = arith.constant 32 : index
    %c128_38 = arith.constant 128 : index
    %50 = vector.load %arg14[%c32_37, %c128_38] : memref<128x256xf32, #tpu.memory_space<vmem>>, vector<16x64xf32>
    tpu.vector_store %arg14[%c32_37, %c128_38], %49 {strides = array<i32>} : memref<128x256xf32, #tpu.memory_space<vmem>>, vector<16x64xf32>,
    %51 = vector.extract_strided_slice %44 {offsets = [0, 192], sizes = [16, 64], strides = [1, 1]} : vector<16x512xf32> to vector<16x64xf32>
    %c48_39 = arith.constant 48 : index
    %c128_40 = arith.constant 128 : index
    %52 = vector.load %arg14[%c48_39, %c128_40] : memref<128x256xf32, #tpu.memory_space<vmem>>, vector<16x64xf32>
    tpu.vector_store %arg14[%c48_39, %c128_40], %51 {strides = array<i32>} : memref<128x256xf32, #tpu.memory_space<vmem>>, vector<16x64xf32>,
    %53 = vector.extract_strided_slice %44 {offsets = [0, 256], sizes = [16, 64], strides = [1, 1]} : vector<16x512xf32> to vector<16x64xf32>
    %c64_41 = arith.constant 64 : index
    %c128_42 = arith.constant 128 : index
    %54 = vector.load %arg14[%c64_41, %c128_42] : memref<128x256xf32, #tpu.memory_space<vmem>>, vector<16x64xf32>
    tpu.vector_store %arg14[%c64_41, %c128_42], %53 {strides = array<i32>} : memref<128x256xf32, #tpu.memory_space<vmem>>, vector<16x64xf32>,
    %55 = vector.extract_strided_slice %44 {offsets = [0, 320], sizes = [16, 64], strides = [1, 1]} : vector<16x512xf32> to vector<16x64xf32>
    %c80_43 = arith.constant 80 : index
    %c128_44 = arith.constant 128 : index
    %56 = vector.load %arg14[%c80_43, %c128_44] : memref<128x256xf32, #tpu.memory_space<vmem>>, vector<16x64xf32>
    tpu.vector_store %arg14[%c80_43, %c128_44], %55 {strides = array<i32>} : memref<128x256xf32, #tpu.memory_space<vmem>>, vector<16x64xf32>,
    %57 = vector.extract_strided_slice %44 {offsets = [0, 384], sizes = [16, 64], strides = [1, 1]} : vector<16x512xf32> to vector<16x64xf32>
    %c96_45 = arith.constant 96 : index
    %c128_46 = arith.constant 128 : index
    %58 = vector.load %arg14[%c96_45, %c128_46] : memref<128x256xf32, #tpu.memory_space<vmem>>, vector<16x64xf32>
    tpu.vector_store %arg14[%c96_45, %c128_46], %57 {strides = array<i32>} : memref<128x256xf32, #tpu.memory_space<vmem>>, vector<16x64xf32>,
    %59 = vector.extract_strided_slice %44 {offsets = [0, 448], sizes = [16, 64], strides = [1, 1]} : vector<16x512xf32> to vector<16x64xf32>
    %c112_47 = arith.constant 112 : index
    %c128_48 = arith.constant 128 : index
    %60 = vector.load %arg14[%c112_47, %c128_48] : memref<128x256xf32, #tpu.memory_space<vmem>>, vector<16x64xf32>
    tpu.vector_store %arg14[%c112_47, %c128_48], %59 {strides = array<i32>} : memref<128x256xf32, #tpu.memory_space<vmem>>, vector<16x64xf32>,
    %61 = vector.extract_strided_slice %9 {offsets = [48, 0], sizes = [16, 512], strides = [1, 1]} : vector<64x512xf32> to vector<16x512xf32>
    %62 = vector.extract_strided_slice %61 {offsets = [0, 0], sizes = [16, 64], strides = [1, 1]} : vector<16x512xf32> to vector<16x64xf32>
    %c0_49 = arith.constant 0 : index
    %c192 = arith.constant 192 : index
    %63 = vector.load %arg14[%c0_49, %c192] : memref<128x256xf32, #tpu.memory_space<vmem>>, vector<16x64xf32>
    tpu.vector_store %arg14[%c0_49, %c192], %62 {strides = array<i32>} : memref<128x256xf32, #tpu.memory_space<vmem>>, vector<16x64xf32>,
    %64 = vector.extract_strided_slice %61 {offsets = [0, 64], sizes = [16, 64], strides = [1, 1]} : vector<16x512xf32> to vector<16x64xf32>
    %c16_50 = arith.constant 16 : index
    %c192_51 = arith.constant 192 : index
    %65 = vector.load %arg14[%c16_50, %c192_51] : memref<128x256xf32, #tpu.memory_space<vmem>>, vector<16x64xf32>
    tpu.vector_store %arg14[%c16_50, %c192_51], %64 {strides = array<i32>} : memref<128x256xf32, #tpu.memory_space<vmem>>, vector<16x64xf32>,
    %66 = vector.extract_strided_slice %61 {offsets = [0, 128], sizes = [16, 64], strides = [1, 1]} : vector<16x512xf32> to vector<16x64xf32>
    %c32_52 = arith.constant 32 : index
    %c192_53 = arith.constant 192 : index
    %67 = vector.load %arg14[%c32_52, %c192_53] : memref<128x256xf32, #tpu.memory_space<vmem>>, vector<16x64xf32>
    tpu.vector_store %arg14[%c32_52, %c192_53], %66 {strides = array<i32>} : memref<128x256xf32, #tpu.memory_space<vmem>>, vector<16x64xf32>,
    %68 = vector.extract_strided_slice %61 {offsets = [0, 192], sizes = [16, 64], strides = [1, 1]} : vector<16x512xf32> to vector<16x64xf32>
    %c48_54 = arith.constant 48 : index
    %c192_55 = arith.constant 192 : index
    %69 = vector.load %arg14[%c48_54, %c192_55] : memref<128x256xf32, #tpu.memory_space<vmem>>, vector<16x64xf32>
    tpu.vector_store %arg14[%c48_54, %c192_55], %68 {strides = array<i32>} : memref<128x256xf32, #tpu.memory_space<vmem>>, vector<16x64xf32>,
    %70 = vector.extract_strided_slice %61 {offsets = [0, 256], sizes = [16, 64], strides = [1, 1]} : vector<16x512xf32> to vector<16x64xf32>
    %c64_56 = arith.constant 64 : index
    %c192_57 = arith.constant 192 : index
    %71 = vector.load %arg14[%c64_56, %c192_57] : memref<128x256xf32, #tpu.memory_space<vmem>>, vector<16x64xf32>
    tpu.vector_store %arg14[%c64_56, %c192_57], %70 {strides = array<i32>} : memref<128x256xf32, #tpu.memory_space<vmem>>, vector<16x64xf32>,
    %72 = vector.extract_strided_slice %61 {offsets = [0, 320], sizes = [16, 64], strides = [1, 1]} : vector<16x512xf32> to vector<16x64xf32>
    %c80_58 = arith.constant 80 : index
    %c192_59 = arith.constant 192 : index
    %73 = vector.load %arg14[%c80_58, %c192_59] : memref<128x256xf32, #tpu.memory_space<vmem>>, vector<16x64xf32>
    tpu.vector_store %arg14[%c80_58, %c192_59], %72 {strides = array<i32>} : memref<128x256xf32, #tpu.memory_space<vmem>>, vector<16x64xf32>,
    %74 = vector.extract_strided_slice %61 {offsets = [0, 384], sizes = [16, 64], strides = [1, 1]} : vector<16x512xf32> to vector<16x64xf32>
    %c96_60 = arith.constant 96 : index
    %c192_61 = arith.constant 192 : index
    %75 = vector.load %arg14[%c96_60, %c192_61] : memref<128x256xf32, #tpu.memory_space<vmem>>, vector<16x64xf32>
    tpu.vector_store %arg14[%c96_60, %c192_61], %74 {strides = array<i32>} : memref<128x256xf32, #tpu.memory_space<vmem>>, vector<16x64xf32>,
    %76 = vector.extract_strided_slice %61 {offsets = [0, 448], sizes = [16, 64], strides = [1, 1]} : vector<16x512xf32> to vector<16x64xf32>
    %c112_62 = arith.constant 112 : index
    %c192_63 = arith.constant 192 : index
    %77 = vector.load %arg14[%c112_62, %c192_63] : memref<128x256xf32, #tpu.memory_space<vmem>>, vector<16x64xf32>
    tpu.vector_store %arg14[%c112_62, %c192_63], %76 {strides = array<i32>} : memref<128x256xf32, #tpu.memory_space<vmem>>, vector<16x64xf32>,
    %c0_64 = arith.constant 0 : index
    %c0_65 = arith.constant 0 : index
    %78 = vector.load %arg14[%c0_64, %c0_65] : memref<128x256xf32, #tpu.memory_space<vmem>>, vector<128x256xf32>
    %c0_66 = arith.constant 0 : index
    %c0_67 = arith.constant 0 : index
    %79 = vector.load %arg4[%c0_66, %c0_67] : memref<256x32xf32, #tpu.memory_space<vmem>>, vector<256x32xf32>
    %cst_68 = arith.constant dense<0.000000e+00> : vector<128x32xf32>
    %80 = tpu.matmul %78, %79, %cst_68 {dimension_numbers = #tpu.dot_dimension_numbers<[1], [0], [0], [1], [0, 0, 1, 1], [], []>} : vector<128x256xf32>, vector<256x32xf32>, vector<128x32xf32> -> vector<128x32xf32>
    %c0_69 = arith.constant 0 : index
    %c0_70 = arith.constant 0 : index
    %81 = vector.load %arg5[%c0_69, %c0_70] : memref<1x32xf32, #tpu.memory_space<vmem>>, vector<1x32xf32>
    %82 = vector.broadcast %81 : vector<1x32xf32> to vector<128x32xf32>
    %83 = arith.addf %80, %82 : vector<128x32xf32>
    %cst_71 = arith.constant 0.000000e+00 : f32
    %84 = vector.broadcast %cst_71 : f32 to vector<128x32xf32>
    %85 = arith.maximumf %83, %84 : vector<128x32xf32>
    %c0_72 = arith.constant 0 : index
    %c0_73 = arith.constant 0 : index
    %86 = vector.load %arg6[%c0_72, %c0_73] : memref<32x96xf32, #tpu.memory_space<vmem>>, vector<32x96xf32>
    %cst_74 = arith.constant dense<0.000000e+00> : vector<128x96xf32>
    %87 = tpu.matmul %85, %86, %cst_74 {dimension_numbers = #tpu.dot_dimension_numbers<[1], [0], [0], [1], [0, 0, 1, 1], [], []>} : vector<128x32xf32>, vector<32x96xf32>, vector<128x96xf32> -> vector<128x96xf32>
    %c0_75 = arith.constant 0 : index
    %c0_76 = arith.constant 0 : index
    %88 = vector.load %arg7[%c0_75, %c0_76] : memref<1x96xf32, #tpu.memory_space<vmem>>, vector<1x96xf32>
    %89 = vector.broadcast %88 : vector<1x96xf32> to vector<128x96xf32>
    %90 = arith.addf %87, %89 : vector<128x96xf32>
    %c0_77 = arith.constant 0 : index
    %c0_78 = arith.constant 0 : index
    %91 = vector.load %arg15[%c0_77, %c0_78] : memref<128x96xf32, #tpu.memory_space<vmem>>, vector<128x96xf32>
    tpu.vector_store %arg15[%c0_77, %c0_78], %90 {strides = array<i32>} : memref<128x96xf32, #tpu.memory_space<vmem>>, vector<128x96xf32>,
    %c0_79 = arith.constant 0 : index
    %c0_80 = arith.constant 0 : index
    %92 = vector.load %arg8[%c0_79, %c0_80] : memref<32x96xf32, #tpu.memory_space<vmem>>, vector<32x96xf32>
    %c0_81 = arith.constant 0 : index
    %c0_82 = arith.constant 0 : index
    %93 = vector.load %arg9[%c0_81, %c0_82] : memref<1x96xf32, #tpu.memory_space<vmem>>, vector<1x96xf32>
    %cst_83 = arith.constant 0.000000e+00 : f32
    %94 = vector.broadcast %cst_83 : f32 to vector<32x32xf32>
    %c0_84 = arith.constant 0 : index
    %c0_85 = arith.constant 0 : index
    %95 = vector.load %arg15[%c0_84, %c0_85] : memref<128x96xf32, #tpu.memory_space<vmem>>, vector<32x96xf32>
    %cst_86 = arith.constant dense<0.000000e+00> : vector<32x96xf32>
    %96 = tpu.matmul %94, %92, %cst_86 {dimension_numbers = #tpu.dot_dimension_numbers<[1], [0], [0], [1], [0, 0, 1, 1], [], []>} : vector<32x32xf32>, vector<32x96xf32>, vector<32x96xf32> -> vector<32x96xf32>
    %97 = vector.broadcast %93 : vector<1x96xf32> to vector<32x96xf32>
    %98 = arith.addf %96, %97 : vector<32x96xf32>
    %99 = vector.extract_strided_slice %95 {offsets = [0, 0], sizes = [32, 32], strides = [1, 1]} : vector<32x96xf32> to vector<32x32xf32>
    %100 = vector.extract_strided_slice %98 {offsets = [0, 0], sizes = [32, 32], strides = [1, 1]} : vector<32x96xf32> to vector<32x32xf32>
    %101 = arith.addf %99, %100 : vector<32x32xf32>
    %102 = arith.negf %101 : vector<32x32xf32>
    %103 = math.exp %102 : vector<32x32xf32>
    %cst_87 = arith.constant 1.000000e+00 : f32
    %104 = vector.broadcast %cst_87 : f32 to vector<32x32xf32>
    %105 = arith.addf %104, %103 : vector<32x32xf32>
    %106 = arith.divf %104, %105 : vector<32x32xf32>
    %107 = vector.extract_strided_slice %95 {offsets = [0, 32], sizes = [32, 32], strides = [1, 1]} : vector<32x96xf32> to vector<32x32xf32>
    %108 = vector.extract_strided_slice %98 {offsets = [0, 32], sizes = [32, 32], strides = [1, 1]} : vector<32x96xf32> to vector<32x32xf32>
    %109 = arith.addf %107, %108 : vector<32x32xf32>
    %110 = arith.negf %109 : vector<32x32xf32>
    %111 = math.exp %110 : vector<32x32xf32>
    %cst_88 = arith.constant 1.000000e+00 : f32
    %112 = vector.broadcast %cst_88 : f32 to vector<32x32xf32>
    %113 = arith.addf %112, %111 : vector<32x32xf32>
    %114 = arith.divf %112, %113 : vector<32x32xf32>
    %115 = vector.extract_strided_slice %95 {offsets = [0, 64], sizes = [32, 32], strides = [1, 1]} : vector<32x96xf32> to vector<32x32xf32>
    %116 = vector.extract_strided_slice %98 {offsets = [0, 64], sizes = [32, 32], strides = [1, 1]} : vector<32x96xf32> to vector<32x32xf32>
    %117 = arith.mulf %106, %116 : vector<32x32xf32>
    %118 = arith.addf %115, %117 : vector<32x32xf32>
    %119 = math.tanh %118 : vector<32x32xf32>
    %cst_89 = arith.constant 1.000000e+00 : f32
    %120 = vector.broadcast %cst_89 : f32 to vector<32x32xf32>
    %121 = arith.subf %120, %114 : vector<32x32xf32>
    %122 = arith.mulf %121, %119 : vector<32x32xf32>
    %123 = arith.mulf %114, %94 : vector<32x32xf32>
    %124 = arith.addf %122, %123 : vector<32x32xf32>
    %c0_90 = arith.constant 0 : index
    %c0_91 = arith.constant 0 : index
    %125 = vector.load %arg16[%c0_90, %c0_91] : memref<128x32xf32, #tpu.memory_space<vmem>>, vector<32x32xf32>
    tpu.vector_store %arg16[%c0_90, %c0_91], %124 {strides = array<i32>} : memref<128x32xf32, #tpu.memory_space<vmem>>, vector<32x32xf32>,
    %c32_92 = arith.constant 32 : index
    %c0_93 = arith.constant 0 : index
    %126 = vector.load %arg15[%c32_92, %c0_93] : memref<128x96xf32, #tpu.memory_space<vmem>>, vector<32x96xf32>
    %cst_94 = arith.constant dense<0.000000e+00> : vector<32x96xf32>
    %127 = tpu.matmul %124, %92, %cst_94 {dimension_numbers = #tpu.dot_dimension_numbers<[1], [0], [0], [1], [0, 0, 1, 1], [], []>} : vector<32x32xf32>, vector<32x96xf32>, vector<32x96xf32> -> vector<32x96xf32>
    %128 = vector.broadcast %93 : vector<1x96xf32> to vector<32x96xf32>
    %129 = arith.addf %127, %128 : vector<32x96xf32>
    %130 = vector.extract_strided_slice %126 {offsets = [0, 0], sizes = [32, 32], strides = [1, 1]} : vector<32x96xf32> to vector<32x32xf32>
    %131 = vector.extract_strided_slice %129 {offsets = [0, 0], sizes = [32, 32], strides = [1, 1]} : vector<32x96xf32> to vector<32x32xf32>
    %132 = arith.addf %130, %131 : vector<32x32xf32>
    %133 = arith.negf %132 : vector<32x32xf32>
    %134 = math.exp %133 : vector<32x32xf32>
    %cst_95 = arith.constant 1.000000e+00 : f32
    %135 = vector.broadcast %cst_95 : f32 to vector<32x32xf32>
    %136 = arith.addf %135, %134 : vector<32x32xf32>
    %137 = arith.divf %135, %136 : vector<32x32xf32>
    %138 = vector.extract_strided_slice %126 {offsets = [0, 32], sizes = [32, 32], strides = [1, 1]} : vector<32x96xf32> to vector<32x32xf32>
    %139 = vector.extract_strided_slice %129 {offsets = [0, 32], sizes = [32, 32], strides = [1, 1]} : vector<32x96xf32> to vector<32x32xf32>
    %140 = arith.addf %138, %139 : vector<32x32xf32>
    %141 = arith.negf %140 : vector<32x32xf32>
    %142 = math.exp %141 : vector<32x32xf32>
    %cst_96 = arith.constant 1.000000e+00 : f32
    %143 = vector.broadcast %cst_96 : f32 to vector<32x32xf32>
    %144 = arith.addf %143, %142 : vector<32x32xf32>
    %145 = arith.divf %143, %144 : vector<32x32xf32>
    %146 = vector.extract_strided_slice %126 {offsets = [0, 64], sizes = [32, 32], strides = [1, 1]} : vector<32x96xf32> to vector<32x32xf32>
    %147 = vector.extract_strided_slice %129 {offsets = [0, 64], sizes = [32, 32], strides = [1, 1]} : vector<32x96xf32> to vector<32x32xf32>
    %148 = arith.mulf %137, %147 : vector<32x32xf32>
    %149 = arith.addf %146, %148 : vector<32x32xf32>
    %150 = math.tanh %149 : vector<32x32xf32>
    %cst_97 = arith.constant 1.000000e+00 : f32
    %151 = vector.broadcast %cst_97 : f32 to vector<32x32xf32>
    %152 = arith.subf %151, %145 : vector<32x32xf32>
    %153 = arith.mulf %152, %150 : vector<32x32xf32>
    %154 = arith.mulf %145, %124 : vector<32x32xf32>
    %155 = arith.addf %153, %154 : vector<32x32xf32>
    %c32_98 = arith.constant 32 : index
    %c0_99 = arith.constant 0 : index
    %156 = vector.load %arg16[%c32_98, %c0_99] : memref<128x32xf32, #tpu.memory_space<vmem>>, vector<32x32xf32>
    tpu.vector_store %arg16[%c32_98, %c0_99], %155 {strides = array<i32>} : memref<128x32xf32, #tpu.memory_space<vmem>>, vector<32x32xf32>,
    %c64_100 = arith.constant 64 : index
    %c0_101 = arith.constant 0 : index
    %157 = vector.load %arg15[%c64_100, %c0_101] : memref<128x96xf32, #tpu.memory_space<vmem>>, vector<32x96xf32>
    %cst_102 = arith.constant dense<0.000000e+00> : vector<32x96xf32>
    %158 = tpu.matmul %155, %92, %cst_102 {dimension_numbers = #tpu.dot_dimension_numbers<[1], [0], [0], [1], [0, 0, 1, 1], [], []>} : vector<32x32xf32>, vector<32x96xf32>, vector<32x96xf32> -> vector<32x96xf32>
    %159 = vector.broadcast %93 : vector<1x96xf32> to vector<32x96xf32>
    %160 = arith.addf %158, %159 : vector<32x96xf32>
    %161 = vector.extract_strided_slice %157 {offsets = [0, 0], sizes = [32, 32], strides = [1, 1]} : vector<32x96xf32> to vector<32x32xf32>
    %162 = vector.extract_strided_slice %160 {offsets = [0, 0], sizes = [32, 32], strides = [1, 1]} : vector<32x96xf32> to vector<32x32xf32>
    %163 = arith.addf %161, %162 : vector<32x32xf32>
    %164 = arith.negf %163 : vector<32x32xf32>
    %165 = math.exp %164 : vector<32x32xf32>
    %cst_103 = arith.constant 1.000000e+00 : f32
    %166 = vector.broadcast %cst_103 : f32 to vector<32x32xf32>
    %167 = arith.addf %166, %165 : vector<32x32xf32>
    %168 = arith.divf %166, %167 : vector<32x32xf32>
    %169 = vector.extract_strided_slice %157 {offsets = [0, 32], sizes = [32, 32], strides = [1, 1]} : vector<32x96xf32> to vector<32x32xf32>
    %170 = vector.extract_strided_slice %160 {offsets = [0, 32], sizes = [32, 32], strides = [1, 1]} : vector<32x96xf32> to vector<32x32xf32>
    %171 = arith.addf %169, %170 : vector<32x32xf32>
    %172 = arith.negf %171 : vector<32x32xf32>
    %173 = math.exp %172 : vector<32x32xf32>
    %cst_104 = arith.constant 1.000000e+00 : f32
    %174 = vector.broadcast %cst_104 : f32 to vector<32x32xf32>
    %175 = arith.addf %174, %173 : vector<32x32xf32>
    %176 = arith.divf %174, %175 : vector<32x32xf32>
    %177 = vector.extract_strided_slice %157 {offsets = [0, 64], sizes = [32, 32], strides = [1, 1]} : vector<32x96xf32> to vector<32x32xf32>
    %178 = vector.extract_strided_slice %160 {offsets = [0, 64], sizes = [32, 32], strides = [1, 1]} : vector<32x96xf32> to vector<32x32xf32>
    %179 = arith.mulf %168, %178 : vector<32x32xf32>
    %180 = arith.addf %177, %179 : vector<32x32xf32>
    %181 = math.tanh %180 : vector<32x32xf32>
    %cst_105 = arith.constant 1.000000e+00 : f32
    %182 = vector.broadcast %cst_105 : f32 to vector<32x32xf32>
    %183 = arith.subf %182, %176 : vector<32x32xf32>
    %184 = arith.mulf %183, %181 : vector<32x32xf32>
    %185 = arith.mulf %176, %155 : vector<32x32xf32>
    %186 = arith.addf %184, %185 : vector<32x32xf32>
    %c64_106 = arith.constant 64 : index
    %c0_107 = arith.constant 0 : index
    %187 = vector.load %arg16[%c64_106, %c0_107] : memref<128x32xf32, #tpu.memory_space<vmem>>, vector<32x32xf32>
    tpu.vector_store %arg16[%c64_106, %c0_107], %186 {strides = array<i32>} : memref<128x32xf32, #tpu.memory_space<vmem>>, vector<32x32xf32>,
    %c96_108 = arith.constant 96 : index
    %c0_109 = arith.constant 0 : index
    %188 = vector.load %arg15[%c96_108, %c0_109] : memref<128x96xf32, #tpu.memory_space<vmem>>, vector<32x96xf32>
    %cst_110 = arith.constant dense<0.000000e+00> : vector<32x96xf32>
    %189 = tpu.matmul %186, %92, %cst_110 {dimension_numbers = #tpu.dot_dimension_numbers<[1], [0], [0], [1], [0, 0, 1, 1], [], []>} : vector<32x32xf32>, vector<32x96xf32>, vector<32x96xf32> -> vector<32x96xf32>
    %190 = vector.broadcast %93 : vector<1x96xf32> to vector<32x96xf32>
    %191 = arith.addf %189, %190 : vector<32x96xf32>
    %192 = vector.extract_strided_slice %188 {offsets = [0, 0], sizes = [32, 32], strides = [1, 1]} : vector<32x96xf32> to vector<32x32xf32>
    %193 = vector.extract_strided_slice %191 {offsets = [0, 0], sizes = [32, 32], strides = [1, 1]} : vector<32x96xf32> to vector<32x32xf32>
    %194 = arith.addf %192, %193 : vector<32x32xf32>
    %195 = arith.negf %194 : vector<32x32xf32>
    %196 = math.exp %195 : vector<32x32xf32>
    %cst_111 = arith.constant 1.000000e+00 : f32
    %197 = vector.broadcast %cst_111 : f32 to vector<32x32xf32>
    %198 = arith.addf %197, %196 : vector<32x32xf32>
    %199 = arith.divf %197, %198 : vector<32x32xf32>
    %200 = vector.extract_strided_slice %188 {offsets = [0, 32], sizes = [32, 32], strides = [1, 1]} : vector<32x96xf32> to vector<32x32xf32>
    %201 = vector.extract_strided_slice %191 {offsets = [0, 32], sizes = [32, 32], strides = [1, 1]} : vector<32x96xf32> to vector<32x32xf32>
    %202 = arith.addf %200, %201 : vector<32x32xf32>
    %203 = arith.negf %202 : vector<32x32xf32>
    %204 = math.exp %203 : vector<32x32xf32>
    %cst_112 = arith.constant 1.000000e+00 : f32
    %205 = vector.broadcast %cst_112 : f32 to vector<32x32xf32>
    %206 = arith.addf %205, %204 : vector<32x32xf32>
    %207 = arith.divf %205, %206 : vector<32x32xf32>
    %208 = vector.extract_strided_slice %188 {offsets = [0, 64], sizes = [32, 32], strides = [1, 1]} : vector<32x96xf32> to vector<32x32xf32>
    %209 = vector.extract_strided_slice %191 {offsets = [0, 64], sizes = [32, 32], strides = [1, 1]} : vector<32x96xf32> to vector<32x32xf32>
    %210 = arith.mulf %199, %209 : vector<32x32xf32>
    %211 = arith.addf %208, %210 : vector<32x32xf32>
    %212 = math.tanh %211 : vector<32x32xf32>
    %cst_113 = arith.constant 1.000000e+00 : f32
    %213 = vector.broadcast %cst_113 : f32 to vector<32x32xf32>
    %214 = arith.subf %213, %207 : vector<32x32xf32>
    %215 = arith.mulf %214, %212 : vector<32x32xf32>
    %216 = arith.mulf %207, %186 : vector<32x32xf32>
    %217 = arith.addf %215, %216 : vector<32x32xf32>
    %c96_114 = arith.constant 96 : index
    %c0_115 = arith.constant 0 : index
    %218 = vector.load %arg16[%c96_114, %c0_115] : memref<128x32xf32, #tpu.memory_space<vmem>>, vector<32x32xf32>
    tpu.vector_store %arg16[%c96_114, %c0_115], %217 {strides = array<i32>} : memref<128x32xf32, #tpu.memory_space<vmem>>, vector<32x32xf32>,
    %c0_116 = arith.constant 0 : index
    %c0_117 = arith.constant 0 : index
    %219 = vector.load %arg16[%c0_116, %c0_117] : memref<128x32xf32, #tpu.memory_space<vmem>>, vector<128x32xf32>
    %220 = tpu.transpose %219, [1, 0] : vector<128x32xf32> -> vector<32x128xf32>
    %c0_118 = arith.constant 0 : index
    %c0_119 = arith.constant 0 : index
    %221 = vector.load %arg13[%c0_118, %c0_119] : memref<32x128xf32, #tpu.memory_space<vmem>>, vector<32x128xf32>
    tpu.vector_store %arg13[%c0_118, %c0_119], %220 {strides = array<i32>} : memref<32x128xf32, #tpu.memory_space<vmem>>, vector<32x128xf32>,
    %c0_120 = arith.constant 0 : index
    %c0_121 = arith.constant 0 : index
    %222 = vector.load %arg10[%c0_120, %c0_121] : memref<2x32xf32, #tpu.memory_space<vmem>>, vector<2x32xf32>
    %cst_122 = arith.constant dense<0.000000e+00> : vector<2x128xf32>
    %223 = tpu.matmul %222, %220, %cst_122 {dimension_numbers = #tpu.dot_dimension_numbers<[1], [0], [0], [1], [0, 0, 1, 1], [], []>} : vector<2x32xf32>, vector<32x128xf32>, vector<2x128xf32> -> vector<2x128xf32>
    %c0_123 = arith.constant 0 : index
    %c0_124 = arith.constant 0 : index
    %224 = vector.load %arg11[%c0_123, %c0_124] : memref<2x1xf32, #tpu.memory_space<vmem>>, vector<2x1xf32>
    %225 = vector.broadcast %224 : vector<2x1xf32> to vector<2x128xf32>
    %226 = arith.addf %223, %225 : vector<2x128xf32>
    %c0_125 = arith.constant 0 : index
    %c0_126 = arith.constant 0 : index
    %227 = vector.load %arg12[%c0_125, %c0_126] : memref<2x128xf32, #tpu.memory_space<vmem>>, vector<2x128xf32>
    tpu.vector_store %arg12[%c0_125, %c0_126], %226 {strides = array<i32>} : memref<2x128xf32, #tpu.memory_space<vmem>>, vector<2x128xf32>,
    return
  }
}

</mosaic_0001>

<llo_original>
// kernel: _lambda_.1
$region0: #{_lambda_.1}
  #allocation0 [shape = 'u32[]', space=smem, size = 0x4, offset = 0x4, fixed_abs, tag = 'smem constant byte address 0x4 - core index']
  #allocation1 [shape = 'u32[144,128]{1,0:T(1,128)}', space=vmem, size = 0x12000, scoped, tag = 'internal scratch']
  #allocation2 [shape = 'f32[128,256]{1,0:T(8,128)}', space=vmem, size = 0x20000, scoped, tag = 'scratch operand']
  #allocation3 [shape = 'f32[128,96]{1,0:T(8,128)}', space=vmem, size = 0x10000, scoped, tag = 'scratch operand']
  #allocation4 [shape = 'f32[128,32]{1,0:T(8,128)}', space=vmem, size = 0x10000, scoped, tag = 'scratch operand']
  %s0 = inlined_call_operand.vmem [shape: f32[4,512], index: 0, kind: input, shape index: {}]
  %s1 = inlined_call_operand.vmem [shape: f32[64,4], index: 1, kind: input, shape index: {}]
  %s2 = inlined_call_operand.vmem [shape: f32[64,1], index: 2, kind: input, shape index: {}]
  %s3 = inlined_call_operand.vmem [shape: f32[64,64], index: 3, kind: input, shape index: {}]
  %s4 = inlined_call_operand.vmem [shape: f32[256,32], index: 4, kind: input, shape index: {}]
  %s5 = inlined_call_operand.vmem [shape: f32[1,32], index: 5, kind: input, shape index: {}]
  %s6 = inlined_call_operand.vmem [shape: f32[32,96], index: 6, kind: input, shape index: {}]
  %s7 = inlined_call_operand.vmem [shape: f32[1,96], index: 7, kind: input, shape index: {}]
  %s8 = inlined_call_operand.vmem [shape: f32[32,96], index: 8, kind: input, shape index: {}]
  %s9 = inlined_call_operand.vmem [shape: f32[1,96], index: 9, kind: input, shape index: {}]
  %s10 = inlined_call_operand.vmem [shape: f32[2,32], index: 10, kind: input, shape index: {}]
  %s11 = inlined_call_operand.vmem [shape: f32[2,1], index: 11, kind: input, shape index: {}]
  %s12 = inlined_call_operand.vmem [shape: f32[2,128], index: 12, kind: output, shape index: {0}]
  %s13 = inlined_call_operand.vmem [shape: f32[32,128], index: 13, kind: output, shape index: {1}]
  %14 = xla_tuple %s12, %s13
  %s15 = sld [smem:[#allocation0]]
  $region66: #{_lambda_.1} parent=0
    _
  %s17 = ssub.s32 1, %s15
  %s18 = scalar_select 0, %s17, %s15
  // Predicated region
  $region2: #{_lambda_.1} parent=0 // pred_check
    _
  $region3: #{_lambda_.1} parent=0 // pred_check_branch
    %20 = sbr.rel (0) target = $region5
  $region4: #{_lambda_.1} parent=0 // pred_region
    _
  $region5: #{_lambda_.1} parent=0 // pred_fallthru
    _
  // Predicated region
  $region6: #{_lambda_.1} parent=0 // pred_check
    _
  $region7: #{_lambda_.1} parent=0 // pred_check_branch
    %22 = sbr.rel (0) target = $region9
  $region8: #{_lambda_.1} parent=0 // pred_region
    _
  $region9: #{_lambda_.1} parent=0 // pred_fallthru
    _
  // Predicated region
  $region10: #{_lambda_.1} parent=0 // pred_check
    _
  $region11: #{_lambda_.1} parent=0 // pred_check_branch
    %24 = sbr.rel (0) target = $region13
  $region12: #{_lambda_.1} parent=0 // pred_region
    _
  $region13: #{_lambda_.1} parent=0 // pred_fallthru
    _
  // Predicated region
  $region14: #{_lambda_.1} parent=0 // pred_check
    _
  $region15: #{_lambda_.1} parent=0 // pred_check_branch
    %26 = sbr.rel (0) target = $region17
  $region16: #{_lambda_.1} parent=0 // pred_region
    _
  $region17: #{_lambda_.1} parent=0 // pred_fallthru
    _
  // Predicated region
  $region18: #{_lambda_.1} parent=0 // pred_check
    _
  $region19: #{_lambda_.1} parent=0 // pred_check_branch
    %28 = sbr.rel (0) target = $region21
  $region20: #{_lambda_.1} parent=0 // pred_region
    _
  $region21: #{_lambda_.1} parent=0 // pred_fallthru
    _
  // Predicated region
  $region22: #{_lambda_.1} parent=0 // pred_check
    _
  $region23: #{_lambda_.1} parent=0 // pred_check_branch
    %30 = sbr.rel (0) target = $region25
  $region24: #{_lambda_.1} parent=0 // pred_region
    _
  $region25: #{_lambda_.1} parent=0 // pred_fallthru
    _
  // Predicated region
  $region26: #{_lambda_.1} parent=0 // pred_check
    _
  $region27: #{_lambda_.1} parent=0 // pred_check_branch
    %32 = sbr.rel (0) target = $region29
  $region28: #{_lambda_.1} parent=0 // pred_region
    _
  $region29: #{_lambda_.1} parent=0 // pred_fallthru
    _
  // Predicated region
  $region30: #{_lambda_.1} parent=0 // pred_check
    _
  $region31: #{_lambda_.1} parent=0 // pred_check_branch
    %34 = sbr.rel (0) target = $region33
  $region32: #{_lambda_.1} parent=0 // pred_region
    _
  $region33: #{_lambda_.1} parent=0 // pred_fallthru
    _
  // Predicated region
  $region34: #{_lambda_.1} parent=0 // pred_check
    _
  $region35: #{_lambda_.1} parent=0 // pred_check_branch
    %36 = sbr.rel (0) target = $region37
  $region36: #{_lambda_.1} parent=0 // pred_region
    _
  $region37: #{_lambda_.1} parent=0 // pred_fallthru
    _
  // Predicated region
  $region38: #{_lambda_.1} parent=0 // pred_check
    _
  $region39: #{_lambda_.1} parent=0 // pred_check_branch
    %38 = sbr.rel (0) target = $region41
  $region40: #{_lambda_.1} parent=0 // pred_region
    _
  $region41: #{_lambda_.1} parent=0 // pred_fallthru
    _
  // Predicated region
  $region42: #{_lambda_.1} parent=0 // pred_check
    _
  $region43: #{_lambda_.1} parent=0 // pred_check_branch
    %40 = sbr.rel (0) target = $region45
  $region44: #{_lambda_.1} parent=0 // pred_region
    _
  $region45: #{_lambda_.1} parent=0 // pred_fallthru
    _
  // Predicated region
  $region46: #{_lambda_.1} parent=0 // pred_check
    _
  $region47: #{_lambda_.1} parent=0 // pred_check_branch
    %42 = sbr.rel (0) target = $region49
  $region48: #{_lambda_.1} parent=0 // pred_region
    _
  $region49: #{_lambda_.1} parent=0 // pred_fallthru
    _
  %v43 = vld [vmem:[%s1] sm:$0xff]
  %v44 = vld [vmem:[%s1 + $0x8] sm:$0xff]
  %v45 = vld [vmem:[%s1 + $0x10] sm:$0xff]
  %v46 = vld [vmem:[%s1 + $0x18] sm:$0xff]
  %v47 = vld [vmem:[%s1 + $0x20] sm:$0xff]
  %v48 = vld [vmem:[%s1 + $0x28] sm:$0xff]
  %v49 = vld [vmem:[%s1 + $0x30] sm:$0xff]
  %v50 = vld [vmem:[%s1 + $0x38] sm:$0xff]
  %v51 = vld [vmem:[%s0] sm:$0xff]
  %v52 = vld [vmem:[%s0 + $0x8] sm:$0xff]
  %v53 = vld [vmem:[%s2] sm:$0xff]
  %v54 = vld [vmem:[%s2 + $0x8] sm:$0xff]
  %v55 = vld [vmem:[%s2 + $0x10] sm:$0xff]
  %v56 = vld [vmem:[%s2 + $0x18] sm:$0xff]
  %v57 = vld [vmem:[%s2 + $0x20] sm:$0xff]
  %v58 = vld [vmem:[%s2 + $0x28] sm:$0xff]
  %v59 = vld [vmem:[%s2 + $0x30] sm:$0xff]
  %v60 = vld [vmem:[%s2 + $0x38] sm:$0xff]
  %62 = vset.pattern.permute.xlu0 0
  %63 = vperm.xlu0 %62, %v53
  %v64 = vpop.permute.xlu0 %63
  %67 = vset.pattern.permute.xlu0 0
  %68 = vperm.xlu0 %67, %v54
  %v69 = vpop.permute.xlu0 %68
  %72 = vset.pattern.permute.xlu0 0
  %73 = vperm.xlu0 %72, %v55
  %v74 = vpop.permute.xlu0 %73
  %77 = vset.pattern.permute.xlu0 0
  %78 = vperm.xlu0 %77, %v56
  %v79 = vpop.permute.xlu0 %78
  %82 = vset.pattern.permute.xlu0 0
  %83 = vperm.xlu0 %82, %v57
  %v84 = vpop.permute.xlu0 %83
  %87 = vset.pattern.permute.xlu0 0
  %88 = vperm.xlu0 %87, %v58
  %v89 = vpop.permute.xlu0 %88
  %92 = vset.pattern.permute.xlu0 0
  %93 = vperm.xlu0 %92, %v59
  %v94 = vpop.permute.xlu0 %93
  %97 = vset.pattern.permute.xlu0 0
  %98 = vperm.xlu0 %97, %v60
  %v99 = vpop.permute.xlu0 %98
  %v103 = vcombine.high %v51, %v51
  %v104 = vcombine.high %v52, %v52
  %vm105 = vcmask 31744
  %v107 = vsel %vm105, %v43, 0
  %v110 = vsel %vm105, %v44, 0
  %v113 = vsel %vm105, %v45, 0
  %v116 = vsel %vm105, %v46, 0
  %v119 = vsel %vm105, %v47, 0
  %v122 = vsel %vm105, %v48, 0
  %v125 = vsel %vm105, %v49, 0
  %v128 = vsel %vm105, %v50, 0
  %vm130 = vcmask 1043456
  %v131 = vsel %vm130, %v51, 0
  %v133 = vsel %vm130, %v103, 0
  %v135 = vsel %vm130, %v52, 0
  %v137 = vsel %vm130, %v104, 0
  %139 = vmatprep.subr.mxu0 0.0
  %140 = vmatpush1.msra.mxu0 0.0
  %141 = vmatprep.subr.mxu0 0.0
  %142 = vmatpush1.msra.mxu0 0.0
  %143 = vmatprep.subr.mxu0 0.0
  %144 = vmatpush1.msra.mxu0 0.0
  %145 = vmatprep.subr.mxu0 0.0
  %146 = vmatpush1.msra.mxu0 0.0
  %147 = vmatprep.subr.mxu0 0.0
  %148 = vmatpush1.msra.mxu0 0.0
  %149 = vmatprep.subr.mxu0 0.0
  %150 = vmatpush1.msra.mxu0 0.0
  %151 = vmatprep.subr.mxu0 0.0
  %152 = vmatpush1.msra.mxu0 0.0
  %153 = vmatprep.subr.mxu0 0.0
  %154 = vmatpush1.msra.mxu0 0.0
  %155 = vmatprep.subr.mxu0 0.0
  %156 = vmatpush1.msra.mxu0 0.0
  %157 = vmatprep.subr.mxu0 0.0
  %158 = vmatpush1.msra.mxu0 0.0
  %159 = vmatprep.subr.mxu0 0.0
  %160 = vmatpush1.msra.mxu0 0.0
  %161 = vmatprep.subr.mxu0 0.0
  %162 = vmatpush1.msra.mxu0 0.0
  %163 = vmatprep.subr.mxu0 0.0
  %164 = vmatpush1.msra.mxu0 0.0
  %165 = vmatprep.subr.mxu0 0.0
  %166 = vmatpush1.msra.mxu0 0.0
  %167 = vmatprep.subr.mxu0 0.0
  %168 = vmatpush1.msra.mxu0 0.0
  %169 = vmatprep.subr.mxu0 %v133
  %170 = vmatpush1.msra.mxu0 %v131
  %171 = vmatprep.subr.mxu0 0.0
  %172 = vmatpush2.msra.mxu0 0.0
  %173 = vmatprep.subr.mxu0 0.0
  %174 = vmatpush2.msra.mxu0 0.0
  %175 = vmatprep.subr.mxu0 0.0
  %176 = vmatpush2.msra.mxu0 0.0
  %177 = vmatprep.subr.mxu0 0.0
  %178 = vmatpush2.msra.mxu0 0.0
  %179 = vmatprep.subr.mxu0 0.0
  %180 = vmatpush2.msra.mxu0 0.0
  %181 = vmatprep.subr.mxu0 0.0
  %182 = vmatpush2.msra.mxu0 0.0
  %183 = vmatprep.subr.mxu0 0.0
  %184 = vmatpush2.msra.mxu0 0.0
  %185 = vmatprep.subr.mxu0 0.0
  %186 = vmatpush2.msra.mxu0 0.0
  %187 = vmatprep.subr.mxu0 0.0
  %188 = vmatpush2.msra.mxu0 0.0
  %189 = vmatprep.subr.mxu0 0.0
  %190 = vmatpush2.msra.mxu0 0.0
  %191 = vmatprep.subr.mxu0 0.0
  %192 = vmatpush2.msra.mxu0 0.0
  %193 = vmatprep.subr.mxu0 0.0
  %194 = vmatpush2.msra.mxu0 0.0
  %195 = vmatprep.subr.mxu0 0.0
  %196 = vmatpush2.msra.mxu0 0.0
  %197 = vmatprep.subr.mxu0 0.0
  %198 = vmatpush2.msra.mxu0 0.0
  %199 = vmatprep.subr.mxu0 0.0
  %200 = vmatpush2.msra.mxu0 0.0
  %201 = vmatprep.subr.mxu0 0.0
  %202 = vmatpush2.msra.mxu0 0.0
  %203 = vmatprep.mubr.f32.mxu0 0.0
  %204 = vmatmul.mubr.f32.gmra.mxu0 %v107
  %v205 = vpop.f32.mrf.mxu0
  %v206 = vadd.f32 %v64, %v205
  %v207 = vpop.f32.mrf.mxu0
  %v208 = vadd.f32 %v64, %v207
  %209 = vmatprep.mubr.f32.mxu0 0.0
  %210 = vmatmul.mubr.f32.gmra.mxu0 %v110
  %v211 = vpop.f32.mrf.mxu0
  %v212 = vadd.f32 %v69, %v211
  %v213 = vpop.f32.mrf.mxu0
  %v214 = vadd.f32 %v69, %v213
  %215 = vmatprep.mubr.f32.mxu0 0.0
  %216 = vmatmul.mubr.f32.gmra.mxu0 %v113
  %v217 = vpop.f32.mrf.mxu0
  %v218 = vadd.f32 %v74, %v217
  %v219 = vpop.f32.mrf.mxu0
  %v220 = vadd.f32 %v74, %v219
  %221 = vmatprep.mubr.f32.mxu0 0.0
  %222 = vmatmul.mubr.f32.gmra.mxu0 %v116
  %v223 = vpop.f32.mrf.mxu0
  %v224 = vadd.f32 %v79, %v223
  %v225 = vpop.f32.mrf.mxu0
  %v226 = vadd.f32 %v79, %v225
  %227 = vmatprep.mubr.f32.mxu0 0.0
  %228 = vmatmul.mubr.f32.gmra.mxu0 %v119
  %v229 = vpop.f32.mrf.mxu0
  %v230 = vadd.f32 %v84, %v229
  %v231 = vpop.f32.mrf.mxu0
  %v232 = vadd.f32 %v84, %v231
  %233 = vmatprep.mubr.f32.mxu0 0.0
  %234 = vmatmul.mubr.f32.gmra.mxu0 %v122
  %v235 = vpop.f32.mrf.mxu0
  %v236 = vadd.f32 %v89, %v235
  %v237 = vpop.f32.mrf.mxu0
  %v238 = vadd.f32 %v89, %v237
  %239 = vmatprep.mubr.f32.mxu0 0.0
  %240 = vmatmul.mubr.f32.gmra.mxu0 %v125
  %v241 = vpop.f32.mrf.mxu0
  %v242 = vadd.f32 %v94, %v241
  %v243 = vpop.f32.mrf.mxu0
  %v244 = vadd.f32 %v94, %v243
  %245 = vmatprep.mubr.f32.mxu0 0.0
  %246 = vmatmul.mubr.f32.gmra.mxu0 %v128
  %v247 = vpop.f32.mrf.mxu0
  %v248 = vadd.f32 %v99, %v247
  %v249 = vpop.f32.mrf.mxu0
  %v250 = vadd.f32 %v99, %v249
  %251 = vdwg.mxu0
  %252 = vmatprep.subr.mxu0 0.0
  %253 = vmatpush1.msra.mxu0 0.0
  %254 = vmatprep.subr.mxu0 0.0
  %255 = vmatpush1.msra.mxu0 0.0
  %256 = vmatprep.subr.mxu0 0.0
  %257 = vmatpush1.msra.mxu0 0.0
  %258 = vmatprep.subr.mxu0 0.0
  %259 = vmatpush1.msra.mxu0 0.0
  %260 = vmatprep.subr.mxu0 0.0
  %261 = vmatpush1.msra.mxu0 0.0
  %262 = vmatprep.subr.mxu0 0.0
  %263 = vmatpush1.msra.mxu0 0.0
  %264 = vmatprep.subr.mxu0 0.0
  %265 = vmatpush1.msra.mxu0 0.0
  %266 = vmatprep.subr.mxu0 0.0
  %267 = vmatpush1.msra.mxu0 0.0
  %268 = vmatprep.subr.mxu0 0.0
  %269 = vmatpush1.msra.mxu0 0.0
  %270 = vmatprep.subr.mxu0 0.0
  %271 = vmatpush1.msra.mxu0 0.0
  %272 = vmatprep.subr.mxu0 0.0
  %273 = vmatpush1.msra.mxu0 0.0
  %274 = vmatprep.subr.mxu0 0.0
  %275 = vmatpush1.msra.mxu0 0.0
  %276 = vmatprep.subr.mxu0 0.0
  %277 = vmatpush1.msra.mxu0 0.0
  %278 = vmatprep.subr.mxu0 0.0
  %279 = vmatpush1.msra.mxu0 0.0
  %280 = vmatprep.subr.mxu0 0.0
  %281 = vmatpush1.msra.mxu0 0.0
  %282 = vmatprep.subr.mxu0 %v137
  %283 = vmatpush1.msra.mxu0 %v135
  %284 = vmatprep.subr.mxu0 0.0
  %285 = vmatpush2.msra.mxu0 0.0
  %286 = vmatprep.subr.mxu0 0.0
  %287 = vmatpush2.msra.mxu0 0.0
  %288 = vmatprep.subr.mxu0 0.0
  %289 = vmatpush2.msra.mxu0 0.0
  %290 = vmatprep.subr.mxu0 0.0
  %291 = vmatpush2.msra.mxu0 0.0
  %292 = vmatprep.subr.mxu0 0.0
  %293 = vmatpush2.msra.mxu0 0.0
  %294 = vmatprep.subr.mxu0 0.0
  %295 = vmatpush2.msra.mxu0 0.0
  %296 = vmatprep.subr.mxu0 0.0
  %297 = vmatpush2.msra.mxu0 0.0
  %298 = vmatprep.subr.mxu0 0.0
  %299 = vmatpush2.msra.mxu0 0.0
  %300 = vmatprep.subr.mxu0 0.0
  %301 = vmatpush2.msra.mxu0 0.0
  %302 = vmatprep.subr.mxu0 0.0
  %303 = vmatpush2.msra.mxu0 0.0
  %304 = vmatprep.subr.mxu0 0.0
  %305 = vmatpush2.msra.mxu0 0.0
  %306 = vmatprep.subr.mxu0 0.0
  %307 = vmatpush2.msra.mxu0 0.0
  %308 = vmatprep.subr.mxu0 0.0
  %309 = vmatpush2.msra.mxu0 0.0
  %310 = vmatprep.subr.mxu0 0.0
  %311 = vmatpush2.msra.mxu0 0.0
  %312 = vmatprep.subr.mxu0 0.0
  %313 = vmatpush2.msra.mxu0 0.0
  %314 = vmatprep.subr.mxu0 0.0
  %315 = vmatpush2.msra.mxu0 0.0
  %316 = vmatprep.mubr.f32.mxu0 0.0
  %317 = vmatmul.mubr.f32.gmra.mxu0 %v107
  %v318 = vpop.f32.mrf.mxu0
  %v319 = vadd.f32 %v64, %v318
  %v320 = vpop.f32.mrf.mxu0
  %v321 = vadd.f32 %v64, %v320
  %322 = vmatprep.mubr.f32.mxu0 0.0
  %323 = vmatmul.mubr.f32.gmra.mxu0 %v110
  %v324 = vpop.f32.mrf.mxu0
  %v325 = vadd.f32 %v69, %v324
  %v326 = vpop.f32.mrf.mxu0
  %v327 = vadd.f32 %v69, %v326
  %328 = vmatprep.mubr.f32.mxu0 0.0
  %329 = vmatmul.mubr.f32.gmra.mxu0 %v113
  %v330 = vpop.f32.mrf.mxu0
  %v331 = vadd.f32 %v74, %v330
  %v332 = vpop.f32.mrf.mxu0
  %v333 = vadd.f32 %v74, %v332
  %334 = vmatprep.mubr.f32.mxu0 0.0
  %335 = vmatmul.mubr.f32.gmra.mxu0 %v116
  %v336 = vpop.f32.mrf.mxu0
  %v337 = vadd.f32 %v79, %v336
  %v338 = vpop.f32.mrf.mxu0
  %v339 = vadd.f32 %v79, %v338
  %340 = vmatprep.mubr.f32.mxu0 0.0
  %341 = vmatmul.mubr.f32.gmra.mxu0 %v119
  %v342 = vpop.f32.mrf.mxu0
  %v343 = vadd.f32 %v84, %v342
  %v344 = vpop.f32.mrf.mxu0
  %v345 = vadd.f32 %v84, %v344
  %346 = vmatprep.mubr.f32.mxu0 0.0
  %347 = vmatmul.mubr.f32.gmra.mxu0 %v122
  %v348 = vpop.f32.mrf.mxu0
  %v349 = vadd.f32 %v89, %v348
  %v350 = vpop.f32.mrf.mxu0
  %v351 = vadd.f32 %v89, %v350
  %352 = vmatprep.mubr.f32.mxu0 0.0
  %353 = vmatmul.mubr.f32.gmra.mxu0 %v125
  %v354 = vpop.f32.mrf.mxu0
  %v355 = vadd.f32 %v94, %v354
  %v356 = vpop.f32.mrf.mxu0
  %v357 = vadd.f32 %v94, %v356
  %358 = vmatprep.mubr.f32.mxu0 0.0
  %359 = vmatmul.mubr.f32.gmra.mxu0 %v128
  %v360 = vpop.f32.mrf.mxu0
  %v361 = vadd.f32 %v99, %v360
  %v362 = vpop.f32.mrf.mxu0
  %v363 = vadd.f32 %v99, %v362
  %364 = vdwg.mxu0
  %v365 = vmax.f32 %v206, 0.0
  %v366 = vmax.f32 %v208, 0.0
  %v367 = vmax.f32 %v319, 0.0
  %v368 = vmax.f32 %v321, 0.0
  %v369 = vmax.f32 %v212, 0.0
  %v370 = vmax.f32 %v214, 0.0
  %v371 = vmax.f32 %v325, 0.0
  %v372 = vmax.f32 %v327, 0.0
  %v373 = vmax.f32 %v218, 0.0
  %v374 = vmax.f32 %v220, 0.0
  %v375 = vmax.f32 %v331, 0.0
  %v376 = vmax.f32 %v333, 0.0
  %v377 = vmax.f32 %v224, 0.0
  %v378 = vmax.f32 %v226, 0.0
  %v379 = vmax.f32 %v337, 0.0
  %v380 = vmax.f32 %v339, 0.0
  %v381 = vmax.f32 %v230, 0.0
  %v382 = vmax.f32 %v232, 0.0
  %v383 = vmax.f32 %v343, 0.0
  %v384 = vmax.f32 %v345, 0.0
  %v385 = vmax.f32 %v236, 0.0
  %v386 = vmax.f32 %v238, 0.0
  %v387 = vmax.f32 %v349, 0.0
  %v388 = vmax.f32 %v351, 0.0
  %v389 = vmax.f32 %v242, 0.0
  %v390 = vmax.f32 %v244, 0.0
  %v391 = vmax.f32 %v355, 0.0
  %v392 = vmax.f32 %v357, 0.0
  %v393 = vmax.f32 %v248, 0.0
  %v394 = vmax.f32 %v250, 0.0
  %v395 = vmax.f32 %v361, 0.0
  %v396 = vmax.f32 %v363, 0.0
  %v397 = vld [vmem:[%s3] sm:$0xff]
  %v398 = vld [vmem:[%s3 + $0x8] sm:$0xff]
  %v399 = vld [vmem:[%s3 + $0x10] sm:$0xff]
  %v400 = vld [vmem:[%s3 + $0x18] sm:$0xff]
  %v401 = vld [vmem:[%s3 + $0x20] sm:$0xff]
  %v402 = vld [vmem:[%s3 + $0x28] sm:$0xff]
  %v403 = vld [vmem:[%s3 + $0x30] sm:$0xff]
  %v404 = vld [vmem:[%s3 + $0x38] sm:$0xff]
  %vm405 = vcmask 523264
  %v407 = vsel %vm405, %v397, 0
  %v410 = vsel %vm405, %v398, 0
  %v413 = vsel %vm405, %v399, 0
  %v416 = vsel %vm405, %v400, 0
  %v419 = vsel %vm405, %v401, 0
  %v422 = vsel %vm405, %v402, 0
  %v425 = vsel %vm405, %v403, 0
  %v428 = vsel %vm405, %v404, 0
  %430 = vmatprep.subr.mxu0 0.0
  %431 = vmatpush1.msra.mxu0 0.0
  %432 = vmatprep.subr.mxu0 0.0
  %433 = vmatpush1.msra.mxu0 0.0
  %434 = vmatprep.subr.mxu0 0.0
  %435 = vmatpush1.msra.mxu0 0.0
  %436 = vmatprep.subr.mxu0 0.0
  %437 = vmatpush1.msra.mxu0 0.0
  %438 = vmatprep.subr.mxu0 0.0
  %439 = vmatpush1.msra.mxu0 0.0
  %440 = vmatprep.subr.mxu0 0.0
  %441 = vmatpush1.msra.mxu0 0.0
  %442 = vmatprep.subr.mxu0 0.0
  %443 = vmatpush1.msra.mxu0 0.0
  %444 = vmatprep.subr.mxu0 0.0
  %445 = vmatpush1.msra.mxu0 0.0
  %446 = vmatprep.subr.mxu0 %v394
  %447 = vmatpush1.msra.mxu0 %v393
  %448 = vmatprep.subr.mxu0 %v390
  %449 = vmatpush1.msra.mxu0 %v389
  %450 = vmatprep.subr.mxu0 %v386
  %451 = vmatpush1.msra.mxu0 %v385
  %452 = vmatprep.subr.mxu0 %v382
  %453 = vmatpush1.msra.mxu0 %v381
  %454 = vmatprep.subr.mxu0 %v378
  %455 = vmatpush1.msra.mxu0 %v377
  %456 = vmatprep.subr.mxu0 %v374
  %457 = vmatpush1.msra.mxu0 %v373
  %458 = vmatprep.subr.mxu0 %v370
  %459 = vmatpush1.msra.mxu0 %v369
  %460 = vmatprep.subr.mxu0 %v366
  %461 = vmatpush1.msra.mxu0 %v365
  %462 = vmatprep.subr.mxu0 0.0
  %463 = vmatpush2.msra.mxu0 0.0
  %464 = vmatprep.subr.mxu0 0.0
  %465 = vmatpush2.msra.mxu0 0.0
  %466 = vmatprep.subr.mxu0 0.0
  %467 = vmatpush2.msra.mxu0 0.0
  %468 = vmatprep.subr.mxu0 0.0
  %469 = vmatpush2.msra.mxu0 0.0
  %470 = vmatprep.subr.mxu0 0.0
  %471 = vmatpush2.msra.mxu0 0.0
  %472 = vmatprep.subr.mxu0 0.0
  %473 = vmatpush2.msra.mxu0 0.0
  %474 = vmatprep.subr.mxu0 0.0
  %475 = vmatpush2.msra.mxu0 0.0
  %476 = vmatprep.subr.mxu0 0.0
  %477 = vmatpush2.msra.mxu0 0.0
  %478 = vmatprep.subr.mxu0 0.0
  %479 = vmatpush2.msra.mxu0 0.0
  %480 = vmatprep.subr.mxu0 0.0
  %481 = vmatpush2.msra.mxu0 0.0
  %482 = vmatprep.subr.mxu0 0.0
  %483 = vmatpush2.msra.mxu0 0.0
  %484 = vmatprep.subr.mxu0 0.0
  %485 = vmatpush2.msra.mxu0 0.0
  %486 = vmatprep.subr.mxu0 0.0
  %487 = vmatpush2.msra.mxu0 0.0
  %488 = vmatprep.subr.mxu0 0.0
  %489 = vmatpush2.msra.mxu0 0.0
  %490 = vmatprep.subr.mxu0 0.0
  %491 = vmatpush2.msra.mxu0 0.0
  %492 = vmatprep.subr.mxu0 0.0
  %493 = vmatpush2.msra.mxu0 0.0
  %494 = vmatprep.mubr.f32.mxu0 0.0
  %495 = vmatmul.mubr.f32.gmra.mxu0 %v407
  %v496 = vpop.f32.mrf.mxu0
  %v497 = vadd.f32 0.0, %v496
  %v498 = vpop.f32.mrf.mxu0
  %v499 = vadd.f32 0.0, %v498
  %500 = vmatprep.mubr.f32.mxu0 0.0
  %501 = vmatmul.mubr.f32.gmra.mxu0 %v410
  %v502 = vpop.f32.mrf.mxu0
  %v503 = vadd.f32 0.0, %v502
  %v504 = vpop.f32.mrf.mxu0
  %v505 = vadd.f32 0.0, %v504
  %506 = vmatprep.mubr.f32.mxu0 0.0
  %507 = vmatmul.mubr.f32.gmra.mxu0 %v413
  %v508 = vpop.f32.mrf.mxu0
  %v509 = vadd.f32 0.0, %v508
  %v510 = vpop.f32.mrf.mxu0
  %v511 = vadd.f32 0.0, %v510
  %512 = vmatprep.mubr.f32.mxu0 0.0
  %513 = vmatmul.mubr.f32.gmra.mxu0 %v416
  %v514 = vpop.f32.mrf.mxu0
  %v515 = vadd.f32 0.0, %v514
  %v516 = vpop.f32.mrf.mxu0
  %v517 = vadd.f32 0.0, %v516
  %518 = vmatprep.mubr.f32.mxu0 0.0
  %519 = vmatmul.mubr.f32.gmra.mxu0 %v419
  %v520 = vpop.f32.mrf.mxu0
  %v521 = vadd.f32 0.0, %v520
  %v522 = vpop.f32.mrf.mxu0
  %v523 = vadd.f32 0.0, %v522
  %524 = vmatprep.mubr.f32.mxu0 0.0
  %525 = vmatmul.mubr.f32.gmra.mxu0 %v422
  %v526 = vpop.f32.mrf.mxu0
  %v527 = vadd.f32 0.0, %v526
  %v528 = vpop.f32.mrf.mxu0
  %v529 = vadd.f32 0.0, %v528
  %530 = vmatprep.mubr.f32.mxu0 0.0
  %531 = vmatmul.mubr.f32.gmra.mxu0 %v425
  %v532 = vpop.f32.mrf.mxu0
  %v533 = vadd.f32 0.0, %v532
  %v534 = vpop.f32.mrf.mxu0
  %v535 = vadd.f32 0.0, %v534
  %536 = vmatprep.mubr.f32.mxu0 0.0
  %537 = vmatmul.mubr.f32.gmra.mxu0 %v428
  %v538 = vpop.f32.mrf.mxu0
  %v539 = vadd.f32 0.0, %v538
  %v540 = vpop.f32.mrf.mxu0
  %v541 = vadd.f32 0.0, %v540
  %542 = vdwg.mxu0
  %543 = vmatprep.subr.mxu0 0.0
  %544 = vmatpush1.msra.mxu0 0.0
  %545 = vmatprep.subr.mxu0 0.0
  %546 = vmatpush1.msra.mxu0 0.0
  %547 = vmatprep.subr.mxu0 0.0
  %548 = vmatpush1.msra.mxu0 0.0
  %549 = vmatprep.subr.mxu0 0.0
  %550 = vmatpush1.msra.mxu0 0.0
  %551 = vmatprep.subr.mxu0 0.0
  %552 = vmatpush1.msra.mxu0 0.0
  %553 = vmatprep.subr.mxu0 0.0
  %554 = vmatpush1.msra.mxu0 0.0
  %555 = vmatprep.subr.mxu0 0.0
  %556 = vmatpush1.msra.mxu0 0.0
  %557 = vmatprep.subr.mxu0 0.0
  %558 = vmatpush1.msra.mxu0 0.0
  %559 = vmatprep.subr.mxu0 %v396
  %560 = vmatpush1.msra.mxu0 %v395
  %561 = vmatprep.subr.mxu0 %v392
  %562 = vmatpush1.msra.mxu0 %v391
  %563 = vmatprep.subr.mxu0 %v388
  %564 = vmatpush1.msra.mxu0 %v387
  %565 = vmatprep.subr.mxu0 %v384
  %566 = vmatpush1.msra.mxu0 %v383
  %567 = vmatprep.subr.mxu0 %v380
  %568 = vmatpush1.msra.mxu0 %v379
  %569 = vmatprep.subr.mxu0 %v376
  %570 = vmatpush1.msra.mxu0 %v375
  %571 = vmatprep.subr.mxu0 %v372
  %572 = vmatpush1.msra.mxu0 %v371
  %573 = vmatprep.subr.mxu0 %v368
  %574 = vmatpush1.msra.mxu0 %v367
  %575 = vmatprep.subr.mxu0 0.0
  %576 = vmatpush2.msra.mxu0 0.0
  %577 = vmatprep.subr.mxu0 0.0
  %578 = vmatpush2.msra.mxu0 0.0
  %579 = vmatprep.subr.mxu0 0.0
  %580 = vmatpush2.msra.mxu0 0.0
  %581 = vmatprep.subr.mxu0 0.0
  %582 = vmatpush2.msra.mxu0 0.0
  %583 = vmatprep.subr.mxu0 0.0
  %584 = vmatpush2.msra.mxu0 0.0
  %585 = vmatprep.subr.mxu0 0.0
  %586 = vmatpush2.msra.mxu0 0.0
  %587 = vmatprep.subr.mxu0 0.0
  %588 = vmatpush2.msra.mxu0 0.0
  %589 = vmatprep.subr.mxu0 0.0
  %590 = vmatpush2.msra.mxu0 0.0
  %591 = vmatprep.subr.mxu0 0.0
  %592 = vmatpush2.msra.mxu0 0.0
  %593 = vmatprep.subr.mxu0 0.0
  %594 = vmatpush2.msra.mxu0 0.0
  %595 = vmatprep.subr.mxu0 0.0
  %596 = vmatpush2.msra.mxu0 0.0
  %597 = vmatprep.subr.mxu0 0.0
  %598 = vmatpush2.msra.mxu0 0.0
  %599 = vmatprep.subr.mxu0 0.0
  %600 = vmatpush2.msra.mxu0 0.0
  %601 = vmatprep.subr.mxu0 0.0
  %602 = vmatpush2.msra.mxu0 0.0
  %603 = vmatprep.subr.mxu0 0.0
  %604 = vmatpush2.msra.mxu0 0.0
  %605 = vmatprep.subr.mxu0 0.0
  %606 = vmatpush2.msra.mxu0 0.0
  %607 = vmatprep.mubr.f32.mxu0 0.0
  %608 = vmatmul.mubr.f32.gmra.mxu0 %v407
  %v609 = vpop.f32.mrf.mxu0
  %v610 = vadd.f32 0.0, %v609
  %v611 = vpop.f32.mrf.mxu0
  %v612 = vadd.f32 0.0, %v611
  %613 = vmatprep.mubr.f32.mxu0 0.0
  %614 = vmatmul.mubr.f32.gmra.mxu0 %v410
  %v615 = vpop.f32.mrf.mxu0
  %v616 = vadd.f32 0.0, %v615
  %v617 = vpop.f32.mrf.mxu0
  %v618 = vadd.f32 0.0, %v617
  %619 = vmatprep.mubr.f32.mxu0 0.0
  %620 = vmatmul.mubr.f32.gmra.mxu0 %v413
  %v621 = vpop.f32.mrf.mxu0
  %v622 = vadd.f32 0.0, %v621
  %v623 = vpop.f32.mrf.mxu0
  %v624 = vadd.f32 0.0, %v623
  %625 = vmatprep.mubr.f32.mxu0 0.0
  %626 = vmatmul.mubr.f32.gmra.mxu0 %v416
  %v627 = vpop.f32.mrf.mxu0
  %v628 = vadd.f32 0.0, %v627
  %v629 = vpop.f32.mrf.mxu0
  %v630 = vadd.f32 0.0, %v629
  %631 = vmatprep.mubr.f32.mxu0 0.0
  %632 = vmatmul.mubr.f32.gmra.mxu0 %v419
  %v633 = vpop.f32.mrf.mxu0
  %v634 = vadd.f32 0.0, %v633
  %v635 = vpop.f32.mrf.mxu0
  %v636 = vadd.f32 0.0, %v635
  %637 = vmatprep.mubr.f32.mxu0 0.0
  %638 = vmatmul.mubr.f32.gmra.mxu0 %v422
  %v639 = vpop.f32.mrf.mxu0
  %v640 = vadd.f32 0.0, %v639
  %v641 = vpop.f32.mrf.mxu0
  %v642 = vadd.f32 0.0, %v641
  %643 = vmatprep.mubr.f32.mxu0 0.0
  %644 = vmatmul.mubr.f32.gmra.mxu0 %v425
  %v645 = vpop.f32.mrf.mxu0
  %v646 = vadd.f32 0.0, %v645
  %v647 = vpop.f32.mrf.mxu0
  %v648 = vadd.f32 0.0, %v647
  %649 = vmatprep.mubr.f32.mxu0 0.0
  %650 = vmatmul.mubr.f32.gmra.mxu0 %v428
  %v651 = vpop.f32.mrf.mxu0
  %v652 = vadd.f32 0.0, %v651
  %v653 = vpop.f32.mrf.mxu0
  %v654 = vadd.f32 0.0, %v653
  %655 = vdwg.mxu0
  %656 = vst.msk [vmem:[#allocation2] sm:$0xff] %vm405, %v497
  %657 = vst.msk [vmem:[#allocation2 + $0x10] sm:$0xff] %vm405, %v503
  %660 = vrot.lane.b32.xlu0 %v497, 64
  %v661 = vpop.permute.xlu0 %660
  %662 = vrot.lane.b32.xlu0 %v503, 64
  %v663 = vpop.permute.xlu0 %662
  %666 = vst.msk [vmem:[#allocation2 + $0x20] sm:$0xff] %vm405, %v661
  %667 = vst.msk [vmem:[#allocation2 + $0x30] sm:$0xff] %vm405, %v663
  %668 = vst.msk [vmem:[#allocation2 + $0x40] sm:$0xff] %vm405, %v499
  %669 = vst.msk [vmem:[#allocation2 + $0x50] sm:$0xff] %vm405, %v505
  %672 = vrot.lane.b32.xlu0 %v499, 64
  %v673 = vpop.permute.xlu0 %672
  %674 = vrot.lane.b32.xlu0 %v505, 64
  %v675 = vpop.permute.xlu0 %674
  %678 = vst.msk [vmem:[#allocation2 + $0x60] sm:$0xff] %vm405, %v673
  %679 = vst.msk [vmem:[#allocation2 + $0x70] sm:$0xff] %vm405, %v675
  %680 = vst.msk [vmem:[#allocation2 + $0x80] sm:$0xff] %vm405, %v610
  %681 = vst.msk [vmem:[#allocation2 + $0x90] sm:$0xff] %vm405, %v616
  %684 = vrot.lane.b32.xlu0 %v610, 64
  %v685 = vpop.permute.xlu0 %684
  %686 = vrot.lane.b32.xlu0 %v616, 64
  %v687 = vpop.permute.xlu0 %686
  %690 = vst.msk [vmem:[#allocation2 + $0xa0] sm:$0xff] %vm405, %v685
  %691 = vst.msk [vmem:[#allocation2 + $0xb0] sm:$0xff] %vm405, %v687
  %692 = vst.msk [vmem:[#allocation2 + $0xc0] sm:$0xff] %vm405, %v612
  %693 = vst.msk [vmem:[#allocation2 + $0xd0] sm:$0xff] %vm405, %v618
  %696 = vrot.lane.b32.xlu0 %v612, 64
  %v697 = vpop.permute.xlu0 %696
  %698 = vrot.lane.b32.xlu0 %v618, 64
  %v699 = vpop.permute.xlu0 %698
  %702 = vst.msk [vmem:[#allocation2 + $0xe0] sm:$0xff] %vm405, %v697
  %703 = vst.msk [vmem:[#allocation2 + $0xf0] sm:$0xff] %vm405, %v699
  %706 = vrot.lane.b32.xlu0 %v509, 64
  %v707 = vpop.permute.xlu0 %706
  %708 = vrot.lane.b32.xlu0 %v515, 64
  %v709 = vpop.permute.xlu0 %708
  %vm712 = vcmask 1048064
  %713 = vst.msk [vmem:[#allocation2] sm:$0xff] %vm712, %v707
  %714 = vst.msk [vmem:[#allocation2 + $0x10] sm:$0xff] %vm712, %v709
  %715 = vst.msk [vmem:[#allocation2 + $0x20] sm:$0xff] %vm712, %v509
  %716 = vst.msk [vmem:[#allocation2 + $0x30] sm:$0xff] %vm712, %v515
  %719 = vrot.lane.b32.xlu0 %v511, 64
  %v720 = vpop.permute.xlu0 %719
  %721 = vrot.lane.b32.xlu0 %v517, 64
  %v722 = vpop.permute.xlu0 %721
  %725 = vst.msk [vmem:[#allocation2 + $0x40] sm:$0xff] %vm712, %v720
  %726 = vst.msk [vmem:[#allocation2 + $0x50] sm:$0xff] %vm712, %v722
  %727 = vst.msk [vmem:[#allocation2 + $0x60] sm:$0xff] %vm712, %v511
  %728 = vst.msk [vmem:[#allocation2 + $0x70] sm:$0xff] %vm712, %v517
  %731 = vrot.lane.b32.xlu0 %v622, 64
  %v732 = vpop.permute.xlu0 %731
  %733 = vrot.lane.b32.xlu0 %v628, 64
  %v734 = vpop.permute.xlu0 %733
  %737 = vst.msk [vmem:[#allocation2 + $0x80] sm:$0xff] %vm712, %v732
  %738 = vst.msk [vmem:[#allocation2 + $0x90] sm:$0xff] %vm712, %v734
  %739 = vst.msk [vmem:[#allocation2 + $0xa0] sm:$0xff] %vm712, %v622
  %740 = vst.msk [vmem:[#allocation2 + $0xb0] sm:$0xff] %vm712, %v628
  %743 = vrot.lane.b32.xlu0 %v624, 64
  %v744 = vpop.permute.xlu0 %743
  %745 = vrot.lane.b32.xlu0 %v630, 64
  %v746 = vpop.permute.xlu0 %745
  %749 = vst.msk [vmem:[#allocation2 + $0xc0] sm:$0xff] %vm712, %v744
  %750 = vst.msk [vmem:[#allocation2 + $0xd0] sm:$0xff] %vm712, %v746
  %751 = vst.msk [vmem:[#allocation2 + $0xe0] sm:$0xff] %vm712, %v624
  %752 = vst.msk [vmem:[#allocation2 + $0xf0] sm:$0xff] %vm712, %v630
  %753 = vst.msk [vmem:[#allocation2 + $0x8] sm:$0xff] %vm405, %v521
  %754 = vst.msk [vmem:[#allocation2 + $0x18] sm:$0xff] %vm405, %v527
  %757 = vrot.lane.b32.xlu0 %v521, 64
  %v758 = vpop.permute.xlu0 %757
  %759 = vrot.lane.b32.xlu0 %v527, 64
  %v760 = vpop.permute.xlu0 %759
  %763 = vst.msk [vmem:[#allocation2 + $0x28] sm:$0xff] %vm405, %v758
  %764 = vst.msk [vmem:[#allocation2 + $0x38] sm:$0xff] %vm405, %v760
  %765 = vst.msk [vmem:[#allocation2 + $0x48] sm:$0xff] %vm405, %v523
  %766 = vst.msk [vmem:[#allocation2 + $0x58] sm:$0xff] %vm405, %v529
  %769 = vrot.lane.b32.xlu0 %v523, 64
  %v770 = vpop.permute.xlu0 %769
  %771 = vrot.lane.b32.xlu0 %v529, 64
  %v772 = vpop.permute.xlu0 %771
  %775 = vst.msk [vmem:[#allocation2 + $0x68] sm:$0xff] %vm405, %v770
  %776 = vst.msk [vmem:[#allocation2 + $0x78] sm:$0xff] %vm405, %v772
  %777 = vst.msk [vmem:[#allocation2 + $0x88] sm:$0xff] %vm405, %v634
  %778 = vst.msk [vmem:[#allocation2 + $0x98] sm:$0xff] %vm405, %v640
  %781 = vrot.lane.b32.xlu0 %v634, 64
  %v782 = vpop.permute.xlu0 %781
  %783 = vrot.lane.b32.xlu0 %v640, 64
  %v784 = vpop.permute.xlu0 %783
  %787 = vst.msk [vmem:[#allocation2 + $0xa8] sm:$0xff] %vm405, %v782
  %788 = vst.msk [vmem:[#allocation2 + $0xb8] sm:$0xff] %vm405, %v784
  %789 = vst.msk [vmem:[#allocation2 + $0xc8] sm:$0xff] %vm405, %v636
  %790 = vst.msk [vmem:[#allocation2 + $0xd8] sm:$0xff] %vm405, %v642
  %793 = vrot.lane.b32.xlu0 %v636, 64
  %v794 = vpop.permute.xlu0 %793
  %795 = vrot.lane.b32.xlu0 %v642, 64
  %v796 = vpop.permute.xlu0 %795
  %799 = vst.msk [vmem:[#allocation2 + $0xe8] sm:$0xff] %vm405, %v794
  %800 = vst.msk [vmem:[#allocation2 + $0xf8] sm:$0xff] %vm405, %v796
  %803 = vrot.lane.b32.xlu0 %v533, 64
  %v804 = vpop.permute.xlu0 %803
  %805 = vrot.lane.b32.xlu0 %v539, 64
  %v806 = vpop.permute.xlu0 %805
  %809 = vst.msk [vmem:[#allocation2 + $0x8] sm:$0xff] %vm712, %v804
  %810 = vst.msk [vmem:[#allocation2 + $0x18] sm:$0xff] %vm712, %v806
  %811 = vst.msk [vmem:[#allocation2 + $0x28] sm:$0xff] %vm712, %v533
  %812 = vst.msk [vmem:[#allocation2 + $0x38] sm:$0xff] %vm712, %v539
  %815 = vrot.lane.b32.xlu0 %v535, 64
  %v816 = vpop.permute.xlu0 %815
  %817 = vrot.lane.b32.xlu0 %v541, 64
  %v818 = vpop.permute.xlu0 %817
  %821 = vst.msk [vmem:[#allocation2 + $0x48] sm:$0xff] %vm712, %v816
  %822 = vst.msk [vmem:[#allocation2 + $0x58] sm:$0xff] %vm712, %v818
  %823 = vst.msk [vmem:[#allocation2 + $0x68] sm:$0xff] %vm712, %v535
  %824 = vst.msk [vmem:[#allocation2 + $0x78] sm:$0xff] %vm712, %v541
  %827 = vrot.lane.b32.xlu0 %v646, 64
  %v828 = vpop.permute.xlu0 %827
  %829 = vrot.lane.b32.xlu0 %v652, 64
  %v830 = vpop.permute.xlu0 %829
  %833 = vst.msk [vmem:[#allocation2 + $0x88] sm:$0xff] %vm712, %v828
  %834 = vst.msk [vmem:[#allocation2 + $0x98] sm:$0xff] %vm712, %v830
  %835 = vst.msk [vmem:[#allocation2 + $0xa8] sm:$0xff] %vm712, %v646
  %836 = vst.msk [vmem:[#allocation2 + $0xb8] sm:$0xff] %vm712, %v652
  %839 = vrot.lane.b32.xlu0 %v648, 64
  %v840 = vpop.permute.xlu0 %839
  %841 = vrot.lane.b32.xlu0 %v654, 64
  %v842 = vpop.permute.xlu0 %841
  %845 = vst.msk [vmem:[#allocation2 + $0xc8] sm:$0xff] %vm712, %v840
  %846 = vst.msk [vmem:[#allocation2 + $0xd8] sm:$0xff] %vm712, %v842
  %847 = vst.msk [vmem:[#allocation2 + $0xe8] sm:$0xff] %vm712, %v648
  %848 = vst.msk [vmem:[#allocation2 + $0xf8] sm:$0xff] %vm712, %v654
  %v849 = vld [vmem:[#allocation2] sm:$0xff]
  %v850 = vld [vmem:[#allocation2 + $0x8] sm:$0xff]
  %v851 = vld [vmem:[#allocation2 + $0x10] sm:$0xff]
  %v852 = vld [vmem:[#allocation2 + $0x18] sm:$0xff]
  %v853 = vld [vmem:[#allocation2 + $0x20] sm:$0xff]
  %v854 = vld [vmem:[#allocation2 + $0x28] sm:$0xff]
  %v855 = vld [vmem:[#allocation2 + $0x30] sm:$0xff]
  %v856 = vld [vmem:[#allocation2 + $0x38] sm:$0xff]
  %v857 = vld [vmem:[#allocation2 + $0x40] sm:$0xff]
  %v858 = vld [vmem:[#allocation2 + $0x48] sm:$0xff]
  %v859 = vld [vmem:[#allocation2 + $0x50] sm:$0xff]
  %v860 = vld [vmem:[#allocation2 + $0x58] sm:$0xff]
  %v861 = vld [vmem:[#allocation2 + $0x60] sm:$0xff]
  %v862 = vld [vmem:[#allocation2 + $0x68] sm:$0xff]
  %v863 = vld [vmem:[#allocation2 + $0x70] sm:$0xff]
  %v864 = vld [vmem:[#allocation2 + $0x78] sm:$0xff]
  %v865 = vld [vmem:[#allocation2 + $0x80] sm:$0xff]
  %v866 = vld [vmem:[#allocation2 + $0x88] sm:$0xff]
  %v867 = vld [vmem:[#allocation2 + $0x90] sm:$0xff]
  %v868 = vld [vmem:[#allocation2 + $0x98] sm:$0xff]
  %v869 = vld [vmem:[#allocation2 + $0xa0] sm:$0xff]
  %v870 = vld [vmem:[#allocation2 + $0xa8] sm:$0xff]
  %v871 = vld [vmem:[#allocation2 + $0xb0] sm:$0xff]
  %v872 = vld [vmem:[#allocation2 + $0xb8] sm:$0xff]
  %v873 = vld [vmem:[#allocation2 + $0xc0] sm:$0xff]
  %v874 = vld [vmem:[#allocation2 + $0xc8] sm:$0xff]
  %v875 = vld [vmem:[#allocation2 + $0xd0] sm:$0xff]
  %v876 = vld [vmem:[#allocation2 + $0xd8] sm:$0xff]
  %v877 = vld [vmem:[#allocation2 + $0xe0] sm:$0xff]
  %v878 = vld [vmem:[#allocation2 + $0xe8] sm:$0xff]
  %v879 = vld [vmem:[#allocation2 + $0xf0] sm:$0xff]
  %v880 = vld [vmem:[#allocation2 + $0xf8] sm:$0xff]
  %v881 = vld [vmem:[%s4] sm:$0xff]
  %v882 = vld [vmem:[%s4 + $0x8] sm:$0xff]
  %v883 = vld [vmem:[%s4 + $0x10] sm:$0xff]
  %v884 = vld [vmem:[%s4 + $0x18] sm:$0xff]
  %v885 = vld [vmem:[%s4 + $0x20] sm:$0xff]
  %v886 = vld [vmem:[%s4 + $0x28] sm:$0xff]
  %v887 = vld [vmem:[%s4 + $0x30] sm:$0xff]
  %v888 = vld [vmem:[%s4 + $0x38] sm:$0xff]
  %v889 = vld [vmem:[%s4 + $0x40] sm:$0xff]
  %v890 = vld [vmem:[%s4 + $0x48] sm:$0xff]
  %v891 = vld [vmem:[%s4 + $0x50] sm:$0xff]
  %v892 = vld [vmem:[%s4 + $0x58] sm:$0xff]
  %v893 = vld [vmem:[%s4 + $0x60] sm:$0xff]
  %v894 = vld [vmem:[%s4 + $0x68] sm:$0xff]
  %v895 = vld [vmem:[%s4 + $0x70] sm:$0xff]
  %v896 = vld [vmem:[%s4 + $0x78] sm:$0xff]
  %v897 = vld [vmem:[%s4 + $0x80] sm:$0xff]
  %v898 = vld [vmem:[%s4 + $0x88] sm:$0xff]
  %v899 = vld [vmem:[%s4 + $0x90] sm:$0xff]
  %v900 = vld [vmem:[%s4 + $0x98] sm:$0xff]
  %v901 = vld [vmem:[%s4 + $0xa0] sm:$0xff]
  %v902 = vld [vmem:[%s4 + $0xa8] sm:$0xff]
  %v903 = vld [vmem:[%s4 + $0xb0] sm:$0xff]
  %v904 = vld [vmem:[%s4 + $0xb8] sm:$0xff]
  %v905 = vld [vmem:[%s4 + $0xc0] sm:$0xff]
  %v906 = vld [vmem:[%s4 + $0xc8] sm:$0xff]
  %v907 = vld [vmem:[%s4 + $0xd0] sm:$0xff]
  %v908 = vld [vmem:[%s4 + $0xd8] sm:$0xff]
  %v909 = vld [vmem:[%s4 + $0xe0] sm:$0xff]
  %v910 = vld [vmem:[%s4 + $0xe8] sm:$0xff]
  %v911 = vld [vmem:[%s4 + $0xf0] sm:$0xff]
  %v912 = vld [vmem:[%s4 + $0xf8] sm:$0xff]
  %v913 = vld [vmem:[%s5] sm:$0x1]
  %v915 = vlaneseq
  %v916 = vshrl.u32 %v915, 7
  %v917 = vsub.s32 0, %v916
  %v918 = vrot.slane %v913, %v917
  %920 = vmatprep.subr.mxu0 0.0
  %921 = vmatpush1.msra.mxu0 %v896
  %922 = vmatprep.subr.mxu0 0.0
  %923 = vmatpush1.msra.mxu0 %v895
  %924 = vmatprep.subr.mxu0 0.0
  %925 = vmatpush1.msra.mxu0 %v894
  %926 = vmatprep.subr.mxu0 0.0
  %927 = vmatpush1.msra.mxu0 %v893
  %928 = vmatprep.subr.mxu0 0.0
  %929 = vmatpush1.msra.mxu0 %v892
  %930 = vmatprep.subr.mxu0 0.0
  %931 = vmatpush1.msra.mxu0 %v891
  %932 = vmatprep.subr.mxu0 0.0
  %933 = vmatpush1.msra.mxu0 %v890
  %934 = vmatprep.subr.mxu0 0.0
  %935 = vmatpush1.msra.mxu0 %v889
  %936 = vmatprep.subr.mxu0 0.0
  %937 = vmatpush1.msra.mxu0 %v888
  %938 = vmatprep.subr.mxu0 0.0
  %939 = vmatpush1.msra.mxu0 %v887
  %940 = vmatprep.subr.mxu0 0.0
  %941 = vmatpush1.msra.mxu0 %v886
  %942 = vmatprep.subr.mxu0 0.0
  %943 = vmatpush1.msra.mxu0 %v885
  %944 = vmatprep.subr.mxu0 0.0
  %945 = vmatpush1.msra.mxu0 %v884
  %946 = vmatprep.subr.mxu0 0.0
  %947 = vmatpush1.msra.mxu0 %v883
  %948 = vmatprep.subr.mxu0 0.0
  %949 = vmatpush1.msra.mxu0 %v882
  %950 = vmatprep.subr.mxu0 0.0
  %951 = vmatpush1.msra.mxu0 %v881
  %952 = vmatprep.subr.mxu0 0.0
  %953 = vmatpush2.msra.mxu0 %v912
  %954 = vmatprep.subr.mxu0 0.0
  %955 = vmatpush2.msra.mxu0 %v911
  %956 = vmatprep.subr.mxu0 0.0
  %957 = vmatpush2.msra.mxu0 %v910
  %958 = vmatprep.subr.mxu0 0.0
  %959 = vmatpush2.msra.mxu0 %v909
  %960 = vmatprep.subr.mxu0 0.0
  %961 = vmatpush2.msra.mxu0 %v908
  %962 = vmatprep.subr.mxu0 0.0
  %963 = vmatpush2.msra.mxu0 %v907
  %964 = vmatprep.subr.mxu0 0.0
  %965 = vmatpush2.msra.mxu0 %v906
  %966 = vmatprep.subr.mxu0 0.0
  %967 = vmatpush2.msra.mxu0 %v905
  %968 = vmatprep.subr.mxu0 0.0
  %969 = vmatpush2.msra.mxu0 %v904
  %970 = vmatprep.subr.mxu0 0.0
  %971 = vmatpush2.msra.mxu0 %v903
  %972 = vmatprep.subr.mxu0 0.0
  %973 = vmatpush2.msra.mxu0 %v902
  %974 = vmatprep.subr.mxu0 0.0
  %975 = vmatpush2.msra.mxu0 %v901
  %976 = vmatprep.subr.mxu0 0.0
  %977 = vmatpush2.msra.mxu0 %v900
  %978 = vmatprep.subr.mxu0 0.0
  %979 = vmatpush2.msra.mxu0 %v899
  %980 = vmatprep.subr.mxu0 0.0
  %981 = vmatpush2.msra.mxu0 %v898
  %982 = vmatprep.subr.mxu0 0.0
  %983 = vmatpush2.msra.mxu0 %v897
  %984 = vmatprep.mubr.f32.mxu0 %v850
  %985 = vmatmul.mubr.f32.gmra.mxu0 %v849
  %v986 = vpop.f32.mrf.mxu0
  %v987 = vadd.f32 %v918, %v986
  %v988 = vpop.f32.mrf.mxu0
  %989 = vmatprep.mubr.f32.mxu0 %v852
  %990 = vmatmul.mubr.f32.gmra.mxu0 %v851
  %v991 = vpop.f32.mrf.mxu0
  %v992 = vadd.f32 %v918, %v991
  %v993 = vpop.f32.mrf.mxu0
  %994 = vmatprep.mubr.f32.mxu0 %v854
  %995 = vmatmul.mubr.f32.gmra.mxu0 %v853
  %v996 = vpop.f32.mrf.mxu0
  %v997 = vadd.f32 %v918, %v996
  %v998 = vpop.f32.mrf.mxu0
  %999 = vmatprep.mubr.f32.mxu0 %v856
  %1000 = vmatmul.mubr.f32.gmra.mxu0 %v855
  %v1001 = vpop.f32.mrf.mxu0
  %v1002 = vadd.f32 %v918, %v1001
  %v1003 = vpop.f32.mrf.mxu0
  %1004 = vmatprep.mubr.f32.mxu0 %v858
  %1005 = vmatmul.mubr.f32.gmra.mxu0 %v857
  %v1006 = vpop.f32.mrf.mxu0
  %v1007 = vadd.f32 %v918, %v1006
  %v1008 = vpop.f32.mrf.mxu0
  %1009 = vmatprep.mubr.f32.mxu0 %v860
  %1010 = vmatmul.mubr.f32.gmra.mxu0 %v859
  %v1011 = vpop.f32.mrf.mxu0
  %v1012 = vadd.f32 %v918, %v1011
  %v1013 = vpop.f32.mrf.mxu0
  %1014 = vmatprep.mubr.f32.mxu0 %v862
  %1015 = vmatmul.mubr.f32.gmra.mxu0 %v861
  %v1016 = vpop.f32.mrf.mxu0
  %v1017 = vadd.f32 %v918, %v1016
  %v1018 = vpop.f32.mrf.mxu0
  %1019 = vmatprep.mubr.f32.mxu0 %v864
  %1020 = vmatmul.mubr.f32.gmra.mxu0 %v863
  %v1021 = vpop.f32.mrf.mxu0
  %v1022 = vadd.f32 %v918, %v1021
  %v1023 = vpop.f32.mrf.mxu0
  %1024 = vmatprep.mubr.f32.mxu0 %v866
  %1025 = vmatmul.mubr.f32.gmra.mxu0 %v865
  %v1026 = vpop.f32.mrf.mxu0
  %v1027 = vadd.f32 %v918, %v1026
  %v1028 = vpop.f32.mrf.mxu0
  %1029 = vmatprep.mubr.f32.mxu0 %v868
  %1030 = vmatmul.mubr.f32.gmra.mxu0 %v867
  %v1031 = vpop.f32.mrf.mxu0
  %v1032 = vadd.f32 %v918, %v1031
  %v1033 = vpop.f32.mrf.mxu0
  %1034 = vmatprep.mubr.f32.mxu0 %v870
  %1035 = vmatmul.mubr.f32.gmra.mxu0 %v869
  %v1036 = vpop.f32.mrf.mxu0
  %v1037 = vadd.f32 %v918, %v1036
  %v1038 = vpop.f32.mrf.mxu0
  %1039 = vmatprep.mubr.f32.mxu0 %v872
  %1040 = vmatmul.mubr.f32.gmra.mxu0 %v871
  %v1041 = vpop.f32.mrf.mxu0
  %v1042 = vadd.f32 %v918, %v1041
  %v1043 = vpop.f32.mrf.mxu0
  %1044 = vmatprep.mubr.f32.mxu0 %v874
  %1045 = vmatmul.mubr.f32.gmra.mxu0 %v873
  %v1046 = vpop.f32.mrf.mxu0
  %v1047 = vadd.f32 %v918, %v1046
  %v1048 = vpop.f32.mrf.mxu0
  %1049 = vmatprep.mubr.f32.mxu0 %v876
  %1050 = vmatmul.mubr.f32.gmra.mxu0 %v875
  %v1051 = vpop.f32.mrf.mxu0
  %v1052 = vadd.f32 %v918, %v1051
  %v1053 = vpop.f32.mrf.mxu0
  %1054 = vmatprep.mubr.f32.mxu0 %v878
  %1055 = vmatmul.mubr.f32.gmra.mxu0 %v877
  %v1056 = vpop.f32.mrf.mxu0
  %v1057 = vadd.f32 %v918, %v1056
  %v1058 = vpop.f32.mrf.mxu0
  %1059 = vmatprep.mubr.f32.mxu0 %v880
  %1060 = vmatmul.mubr.f32.gmra.mxu0 %v879
  %v1061 = vpop.f32.mrf.mxu0
  %v1062 = vadd.f32 %v918, %v1061
  %v1063 = vpop.f32.mrf.mxu0
  %1064 = vdwg.mxu0
  %v1065 = vmax.f32 %v987, 0.0
  %v1066 = vmax.f32 %v992, 0.0
  %v1067 = vmax.f32 %v997, 0.0
  %v1068 = vmax.f32 %v1002, 0.0
  %v1069 = vmax.f32 %v1007, 0.0
  %v1070 = vmax.f32 %v1012, 0.0
  %v1071 = vmax.f32 %v1017, 0.0
  %v1072 = vmax.f32 %v1022, 0.0
  %v1073 = vmax.f32 %v1027, 0.0
  %v1074 = vmax.f32 %v1032, 0.0
  %v1075 = vmax.f32 %v1037, 0.0
  %v1076 = vmax.f32 %v1042, 0.0
  %v1077 = vmax.f32 %v1047, 0.0
  %v1078 = vmax.f32 %v1052, 0.0
  %v1079 = vmax.f32 %v1057, 0.0
  %v1080 = vmax.f32 %v1062, 0.0
  %v1081 = vld [vmem:[%s6] sm:$0xff]
  %v1082 = vld [vmem:[%s6 + $0x8] sm:$0xff]
  %v1083 = vld [vmem:[%s6 + $0x10] sm:$0xff]
  %v1084 = vld [vmem:[%s6 + $0x18] sm:$0xff]
  %v1085 = vld [vmem:[%s7] sm:$0x1]
  %v1087 = vlaneseq
  %v1088 = vshrl.u32 %v1087, 7
  %v1089 = vsub.s32 0, %v1088
  %v1090 = vrot.slane %v1085, %v1089
  %vm1092 = vcmask 261120
  %v1094 = vsel %vm1092, %v1065, 0
  %v1097 = vsel %vm1092, %v1066, 0
  %v1100 = vsel %vm1092, %v1067, 0
  %v1103 = vsel %vm1092, %v1068, 0
  %v1106 = vsel %vm1092, %v1069, 0
  %v1109 = vsel %vm1092, %v1070, 0
  %v1112 = vsel %vm1092, %v1071, 0
  %v1115 = vsel %vm1092, %v1072, 0
  %v1118 = vsel %vm1092, %v1073, 0
  %v1121 = vsel %vm1092, %v1074, 0
  %v1124 = vsel %vm1092, %v1075, 0
  %v1127 = vsel %vm1092, %v1076, 0
  %v1130 = vsel %vm1092, %v1077, 0
  %v1133 = vsel %vm1092, %v1078, 0
  %v1136 = vsel %vm1092, %v1079, 0
  %v1139 = vsel %vm1092, %v1080, 0
  %1141 = vmatprep.subr.mxu0 0.0
  %1142 = vmatpush1.msra.mxu0 0.0
  %1143 = vmatprep.subr.mxu0 0.0
  %1144 = vmatpush1.msra.mxu0 0.0
  %1145 = vmatprep.subr.mxu0 0.0
  %1146 = vmatpush1.msra.mxu0 0.0
  %1147 = vmatprep.subr.mxu0 0.0
  %1148 = vmatpush1.msra.mxu0 0.0
  %1149 = vmatprep.subr.mxu0 0.0
  %1150 = vmatpush1.msra.mxu0 0.0
  %1151 = vmatprep.subr.mxu0 0.0
  %1152 = vmatpush1.msra.mxu0 0.0
  %1153 = vmatprep.subr.mxu0 0.0
  %1154 = vmatpush1.msra.mxu0 0.0
  %1155 = vmatprep.subr.mxu0 0.0
  %1156 = vmatpush1.msra.mxu0 0.0
  %1157 = vmatprep.subr.mxu0 0.0
  %1158 = vmatpush1.msra.mxu0 0.0
  %1159 = vmatprep.subr.mxu0 0.0
  %1160 = vmatpush1.msra.mxu0 0.0
  %1161 = vmatprep.subr.mxu0 0.0
  %1162 = vmatpush1.msra.mxu0 0.0
  %1163 = vmatprep.subr.mxu0 0.0
  %1164 = vmatpush1.msra.mxu0 0.0
  %1165 = vmatprep.subr.mxu0 0.0
  %1166 = vmatpush1.msra.mxu0 %v1084
  %1167 = vmatprep.subr.mxu0 0.0
  %1168 = vmatpush1.msra.mxu0 %v1083
  %1169 = vmatprep.subr.mxu0 0.0
  %1170 = vmatpush1.msra.mxu0 %v1082
  %1171 = vmatprep.subr.mxu0 0.0
  %1172 = vmatpush1.msra.mxu0 %v1081
  %1173 = vmatprep.subr.mxu0 0.0
  %1174 = vmatpush2.msra.mxu0 0.0
  %1175 = vmatprep.subr.mxu0 0.0
  %1176 = vmatpush2.msra.mxu0 0.0
  %1177 = vmatprep.subr.mxu0 0.0
  %1178 = vmatpush2.msra.mxu0 0.0
  %1179 = vmatprep.subr.mxu0 0.0
  %1180 = vmatpush2.msra.mxu0 0.0
  %1181 = vmatprep.subr.mxu0 0.0
  %1182 = vmatpush2.msra.mxu0 0.0
  %1183 = vmatprep.subr.mxu0 0.0
  %1184 = vmatpush2.msra.mxu0 0.0
  %1185 = vmatprep.subr.mxu0 0.0
  %1186 = vmatpush2.msra.mxu0 0.0
  %1187 = vmatprep.subr.mxu0 0.0
  %1188 = vmatpush2.msra.mxu0 0.0
  %1189 = vmatprep.subr.mxu0 0.0
  %1190 = vmatpush2.msra.mxu0 0.0
  %1191 = vmatprep.subr.mxu0 0.0
  %1192 = vmatpush2.msra.mxu0 0.0
  %1193 = vmatprep.subr.mxu0 0.0
  %1194 = vmatpush2.msra.mxu0 0.0
  %1195 = vmatprep.subr.mxu0 0.0
  %1196 = vmatpush2.msra.mxu0 0.0
  %1197 = vmatprep.subr.mxu0 0.0
  %1198 = vmatpush2.msra.mxu0 0.0
  %1199 = vmatprep.subr.mxu0 0.0
  %1200 = vmatpush2.msra.mxu0 0.0
  %1201 = vmatprep.subr.mxu0 0.0
  %1202 = vmatpush2.msra.mxu0 0.0
  %1203 = vmatprep.subr.mxu0 0.0
  %1204 = vmatpush2.msra.mxu0 0.0
  %1205 = vmatprep.mubr.f32.mxu0 0.0
  %1206 = vmatmul.mubr.f32.gmra.mxu0 %v1094
  %v1207 = vpop.f32.mrf.mxu0
  %v1208 = vadd.f32 %v1090, %v1207
  %v1209 = vpop.f32.mrf.mxu0
  %1210 = vmatprep.mubr.f32.mxu0 0.0
  %1211 = vmatmul.mubr.f32.gmra.mxu0 %v1097
  %v1212 = vpop.f32.mrf.mxu0
  %v1213 = vadd.f32 %v1090, %v1212
  %v1214 = vpop.f32.mrf.mxu0
  %1215 = vmatprep.mubr.f32.mxu0 0.0
  %1216 = vmatmul.mubr.f32.gmra.mxu0 %v1100
  %v1217 = vpop.f32.mrf.mxu0
  %v1218 = vadd.f32 %v1090, %v1217
  %v1219 = vpop.f32.mrf.mxu0
  %1220 = vmatprep.mubr.f32.mxu0 0.0
  %1221 = vmatmul.mubr.f32.gmra.mxu0 %v1103
  %v1222 = vpop.f32.mrf.mxu0
  %v1223 = vadd.f32 %v1090, %v1222
  %v1224 = vpop.f32.mrf.mxu0
  %1225 = vmatprep.mubr.f32.mxu0 0.0
  %1226 = vmatmul.mubr.f32.gmra.mxu0 %v1106
  %v1227 = vpop.f32.mrf.mxu0
  %v1228 = vadd.f32 %v1090, %v1227
  %v1229 = vpop.f32.mrf.mxu0
  %1230 = vmatprep.mubr.f32.mxu0 0.0
  %1231 = vmatmul.mubr.f32.gmra.mxu0 %v1109
  %v1232 = vpop.f32.mrf.mxu0
  %v1233 = vadd.f32 %v1090, %v1232
  %v1234 = vpop.f32.mrf.mxu0
  %1235 = vmatprep.mubr.f32.mxu0 0.0
  %1236 = vmatmul.mubr.f32.gmra.mxu0 %v1112
  %v1237 = vpop.f32.mrf.mxu0
  %v1238 = vadd.f32 %v1090, %v1237
  %v1239 = vpop.f32.mrf.mxu0
  %1240 = vmatprep.mubr.f32.mxu0 0.0
  %1241 = vmatmul.mubr.f32.gmra.mxu0 %v1115
  %v1242 = vpop.f32.mrf.mxu0
  %v1243 = vadd.f32 %v1090, %v1242
  %v1244 = vpop.f32.mrf.mxu0
  %1245 = vmatprep.mubr.f32.mxu0 0.0
  %1246 = vmatmul.mubr.f32.gmra.mxu0 %v1118
  %v1247 = vpop.f32.mrf.mxu0
  %v1248 = vadd.f32 %v1090, %v1247
  %v1249 = vpop.f32.mrf.mxu0
  %1250 = vmatprep.mubr.f32.mxu0 0.0
  %1251 = vmatmul.mubr.f32.gmra.mxu0 %v1121
  %v1252 = vpop.f32.mrf.mxu0
  %v1253 = vadd.f32 %v1090, %v1252
  %v1254 = vpop.f32.mrf.mxu0
  %1255 = vmatprep.mubr.f32.mxu0 0.0
  %1256 = vmatmul.mubr.f32.gmra.mxu0 %v1124
  %v1257 = vpop.f32.mrf.mxu0
  %v1258 = vadd.f32 %v1090, %v1257
  %v1259 = vpop.f32.mrf.mxu0
  %1260 = vmatprep.mubr.f32.mxu0 0.0
  %1261 = vmatmul.mubr.f32.gmra.mxu0 %v1127
  %v1262 = vpop.f32.mrf.mxu0
  %v1263 = vadd.f32 %v1090, %v1262
  %v1264 = vpop.f32.mrf.mxu0
  %1265 = vmatprep.mubr.f32.mxu0 0.0
  %1266 = vmatmul.mubr.f32.gmra.mxu0 %v1130
  %v1267 = vpop.f32.mrf.mxu0
  %v1268 = vadd.f32 %v1090, %v1267
  %v1269 = vpop.f32.mrf.mxu0
  %1270 = vmatprep.mubr.f32.mxu0 0.0
  %1271 = vmatmul.mubr.f32.gmra.mxu0 %v1133
  %v1272 = vpop.f32.mrf.mxu0
  %v1273 = vadd.f32 %v1090, %v1272
  %v1274 = vpop.f32.mrf.mxu0
  %1275 = vmatprep.mubr.f32.mxu0 0.0
  %1276 = vmatmul.mubr.f32.gmra.mxu0 %v1136
  %v1277 = vpop.f32.mrf.mxu0
  %v1278 = vadd.f32 %v1090, %v1277
  %v1279 = vpop.f32.mrf.mxu0
  %1280 = vmatprep.mubr.f32.mxu0 0.0
  %1281 = vmatmul.mubr.f32.gmra.mxu0 %v1139
  %v1282 = vpop.f32.mrf.mxu0
  %v1283 = vadd.f32 %v1090, %v1282
  %v1284 = vpop.f32.mrf.mxu0
  %1285 = vdwg.mxu0
  %vm1286 = vcmask 785408
  %1287 = vst.msk [vmem:[#allocation3] sm:$0xff] %vm1286, %v1208
  %1288 = vst.msk [vmem:[#allocation3 + $0x8] sm:$0xff] %vm1286, %v1213
  %1289 = vst.msk [vmem:[#allocation3 + $0x10] sm:$0xff] %vm1286, %v1218
  %1290 = vst.msk [vmem:[#allocation3 + $0x18] sm:$0xff] %vm1286, %v1223
  %1291 = vst.msk [vmem:[#allocation3 + $0x20] sm:$0xff] %vm1286, %v1228
  %1292 = vst.msk [vmem:[#allocation3 + $0x28] sm:$0xff] %vm1286, %v1233
  %1293 = vst.msk [vmem:[#allocation3 + $0x30] sm:$0xff] %vm1286, %v1238
  %1294 = vst.msk [vmem:[#allocation3 + $0x38] sm:$0xff] %vm1286, %v1243
  %1295 = vst.msk [vmem:[#allocation3 + $0x40] sm:$0xff] %vm1286, %v1248
  %1296 = vst.msk [vmem:[#allocation3 + $0x48] sm:$0xff] %vm1286, %v1253
  %1297 = vst.msk [vmem:[#allocation3 + $0x50] sm:$0xff] %vm1286, %v1258
  %1298 = vst.msk [vmem:[#allocation3 + $0x58] sm:$0xff] %vm1286, %v1263
  %1299 = vst.msk [vmem:[#allocation3 + $0x60] sm:$0xff] %vm1286, %v1268
  %1300 = vst.msk [vmem:[#allocation3 + $0x68] sm:$0xff] %vm1286, %v1273
  %1301 = vst.msk [vmem:[#allocation3 + $0x70] sm:$0xff] %vm1286, %v1278
  %1302 = vst.msk [vmem:[#allocation3 + $0x78] sm:$0xff] %vm1286, %v1283
  %v1303 = vld [vmem:[%s8] sm:$0xff]
  %v1304 = vld [vmem:[%s8 + $0x8] sm:$0xff]
  %v1305 = vld [vmem:[%s8 + $0x10] sm:$0xff]
  %v1306 = vld [vmem:[%s8 + $0x18] sm:$0xff]
  %v1307 = vld [vmem:[%s9] sm:$0x1]
  %v1308 = vld [vmem:[#allocation3] sm:$0xff]
  %v1309 = vld [vmem:[#allocation3 + $0x8] sm:$0xff]
  %v1310 = vld [vmem:[#allocation3 + $0x10] sm:$0xff]
  %v1311 = vld [vmem:[#allocation3 + $0x18] sm:$0xff]
  %v1313 = vlaneseq
  %v1314 = vshrl.u32 %v1313, 7
  %v1315 = vsub.s32 0, %v1314
  %v1316 = vrot.slane %v1307, %v1315
  %v1319 = vsel %vm1092, 0.0, 0
  %1321 = vmatprep.subr.mxu0 0.0
  %1322 = vmatpush1.msra.mxu0 0.0
  %1323 = vmatprep.subr.mxu0 0.0
  %1324 = vmatpush1.msra.mxu0 0.0
  %1325 = vmatprep.subr.mxu0 0.0
  %1326 = vmatpush1.msra.mxu0 0.0
  %1327 = vmatprep.subr.mxu0 0.0
  %1328 = vmatpush1.msra.mxu0 0.0
  %1329 = vmatprep.subr.mxu0 0.0
  %1330 = vmatpush1.msra.mxu0 0.0
  %1331 = vmatprep.subr.mxu0 0.0
  %1332 = vmatpush1.msra.mxu0 0.0
  %1333 = vmatprep.subr.mxu0 0.0
  %1334 = vmatpush1.msra.mxu0 0.0
  %1335 = vmatprep.subr.mxu0 0.0
  %1336 = vmatpush1.msra.mxu0 0.0
  %1337 = vmatprep.subr.mxu0 0.0
  %1338 = vmatpush1.msra.mxu0 0.0
  %1339 = vmatprep.subr.mxu0 0.0
  %1340 = vmatpush1.msra.mxu0 0.0
  %1341 = vmatprep.subr.mxu0 0.0
  %1342 = vmatpush1.msra.mxu0 0.0
  %1343 = vmatprep.subr.mxu0 0.0
  %1344 = vmatpush1.msra.mxu0 0.0
  %1345 = vmatprep.subr.mxu0 0.0
  %1346 = vmatpush1.msra.mxu0 %v1306
  %1347 = vmatprep.subr.mxu0 0.0
  %1348 = vmatpush1.msra.mxu0 %v1305
  %1349 = vmatprep.subr.mxu0 0.0
  %1350 = vmatpush1.msra.mxu0 %v1304
  %1351 = vmatprep.subr.mxu0 0.0
  %1352 = vmatpush1.msra.mxu0 %v1303
  %1353 = vmatprep.subr.mxu0 0.0
  %1354 = vmatpush2.msra.mxu0 0.0
  %1355 = vmatprep.subr.mxu0 0.0
  %1356 = vmatpush2.msra.mxu0 0.0
  %1357 = vmatprep.subr.mxu0 0.0
  %1358 = vmatpush2.msra.mxu0 0.0
  %1359 = vmatprep.subr.mxu0 0.0
  %1360 = vmatpush2.msra.mxu0 0.0
  %1361 = vmatprep.subr.mxu0 0.0
  %1362 = vmatpush2.msra.mxu0 0.0
  %1363 = vmatprep.subr.mxu0 0.0
  %1364 = vmatpush2.msra.mxu0 0.0
  %1365 = vmatprep.subr.mxu0 0.0
  %1366 = vmatpush2.msra.mxu0 0.0
  %1367 = vmatprep.subr.mxu0 0.0
  %1368 = vmatpush2.msra.mxu0 0.0
  %1369 = vmatprep.subr.mxu0 0.0
  %1370 = vmatpush2.msra.mxu0 0.0
  %1371 = vmatprep.subr.mxu0 0.0
  %1372 = vmatpush2.msra.mxu0 0.0
  %1373 = vmatprep.subr.mxu0 0.0
  %1374 = vmatpush2.msra.mxu0 0.0
  %1375 = vmatprep.subr.mxu0 0.0
  %1376 = vmatpush2.msra.mxu0 0.0
  %1377 = vmatprep.subr.mxu0 0.0
  %1378 = vmatpush2.msra.mxu0 0.0
  %1379 = vmatprep.subr.mxu0 0.0
  %1380 = vmatpush2.msra.mxu0 0.0
  %1381 = vmatprep.subr.mxu0 0.0
  %1382 = vmatpush2.msra.mxu0 0.0
  %1383 = vmatprep.subr.mxu0 0.0
  %1384 = vmatpush2.msra.mxu0 0.0
  %1385 = vmatprep.mubr.f32.mxu0 0.0
  %1386 = vmatmul.mubr.f32.gmra.mxu0 %v1319
  %v1387 = vpop.f32.mrf.mxu0
  %v1388 = vadd.f32 %v1316, %v1387
  %v1389 = vpop.f32.mrf.mxu0
  %1390 = vmatprep.mubr.f32.mxu0 0.0
  %1391 = vmatmul.mubr.f32.gmra.mxu0 %v1319
  %v1392 = vpop.f32.mrf.mxu0
  %v1393 = vadd.f32 %v1316, %v1392
  %v1394 = vpop.f32.mrf.mxu0
  %1395 = vmatprep.mubr.f32.mxu0 0.0
  %1396 = vmatmul.mubr.f32.gmra.mxu0 %v1319
  %v1397 = vpop.f32.mrf.mxu0
  %v1398 = vadd.f32 %v1316, %v1397
  %v1399 = vpop.f32.mrf.mxu0
  %1400 = vmatprep.mubr.f32.mxu0 0.0
  %1401 = vmatmul.mubr.f32.gmra.mxu0 %v1319
  %v1402 = vpop.f32.mrf.mxu0
  %v1403 = vadd.f32 %v1316, %v1402
  %v1404 = vpop.f32.mrf.mxu0
  %1405 = vdwg.mxu0
  %v1406 = vadd.f32 %v1308, %v1388
  %v1407 = vadd.f32 %v1309, %v1393
  %v1408 = vadd.f32 %v1310, %v1398
  %v1409 = vadd.f32 %v1311, %v1403
  %v1410 = vxor.u32 %v1406, 2147483648
  %v1411 = vxor.u32 %v1407, 2147483648
  %v1412 = vxor.u32 %v1408, 2147483648
  %v1413 = vxor.u32 %v1409, 2147483648
  %v1414 = vmul.f32 %v1410, 1.442695
  %v1415 = vpow.pop %v1414
  %v1416 = vmul.f32 %v1411, 1.442695
  %v1417 = vpow.pop %v1416
  %v1418 = vmul.f32 %v1412, 1.442695
  %v1419 = vpow.pop %v1418
  %v1420 = vmul.f32 %v1413, 1.442695
  %v1421 = vpow.pop %v1420
  %v1422 = vadd.f32 %v1415, 1.0
  %v1423 = vadd.f32 %v1417, 1.0
  %v1424 = vadd.f32 %v1419, 1.0
  %v1425 = vadd.f32 %v1421, 1.0
  %v1426 = vrcp.pop %v1422
  %v1427 = vmul.f32 1.0, %v1426
  %v1428 = vrcp.pop %v1423
  %v1429 = vmul.f32 1.0, %v1428
  %v1430 = vrcp.pop %v1424
  %v1431 = vmul.f32 1.0, %v1430
  %v1432 = vrcp.pop %v1425
  %v1433 = vmul.f32 1.0, %v1432
  %1438 = vrot.lane.b32.xlu0 %v1388, 64
  %v1439 = vpop.permute.xlu0 %1438
  %1440 = vrot.lane.b32.xlu0 %v1393, 64
  %v1441 = vpop.permute.xlu0 %1440
  %1442 = vrot.lane.b32.xlu0 %v1398, 64
  %v1443 = vpop.permute.xlu0 %1442
  %1444 = vrot.lane.b32.xlu0 %v1403, 64
  %v1445 = vpop.permute.xlu0 %1444
  %v1450 = vmul.f32 %v1427, %v1439
  %v1451 = vmul.f32 %v1429, %v1441
  %v1452 = vmul.f32 %v1431, %v1443
  %v1453 = vmul.f32 %v1433, %v1445
  %1458 = vrot.lane.b32.xlu0 %v1450, 64
  %v1459 = vpop.permute.xlu0 %1458
  %1460 = vrot.lane.b32.xlu0 %v1451, 64
  %v1461 = vpop.permute.xlu0 %1460
  %1462 = vrot.lane.b32.xlu0 %v1452, 64
  %v1463 = vpop.permute.xlu0 %1462
  %1464 = vrot.lane.b32.xlu0 %v1453, 64
  %v1465 = vpop.permute.xlu0 %1464
  %v1470 = vadd.f32 %v1308, %v1459
  %v1471 = vadd.f32 %v1309, %v1461
  %v1472 = vadd.f32 %v1310, %v1463
  %v1473 = vadd.f32 %v1311, %v1465
  %v1474 = vtanh.pop %v1470
  %v1475 = vtanh.pop %v1471
  %v1476 = vtanh.pop %v1472
  %v1477 = vtanh.pop %v1473
  %v1478 = vsub.f32 1.0, %v1427
  %v1479 = vsub.f32 1.0, %v1429
  %v1480 = vsub.f32 1.0, %v1431
  %v1481 = vsub.f32 1.0, %v1433
  %1486 = vrot.lane.b32.xlu0 %v1474, 96
  %v1487 = vpop.permute.xlu0 %1486
  %1488 = vrot.lane.b32.xlu0 %v1475, 96
  %v1489 = vpop.permute.xlu0 %1488
  %1490 = vrot.lane.b32.xlu0 %v1476, 96
  %v1491 = vpop.permute.xlu0 %1490
  %1492 = vrot.lane.b32.xlu0 %v1477, 96
  %v1493 = vpop.permute.xlu0 %1492
  %v1498 = vmul.f32 %v1478, %v1487
  %v1499 = vmul.f32 %v1479, %v1489
  %v1500 = vmul.f32 %v1480, %v1491
  %v1501 = vmul.f32 %v1481, %v1493
  %v1502 = vmul.f32 %v1427, 0.0
  %v1503 = vmul.f32 %v1429, 0.0
  %v1504 = vmul.f32 %v1431, 0.0
  %v1505 = vmul.f32 %v1433, 0.0
  %v1506 = vadd.f32 %v1498, %v1502
  %v1507 = vadd.f32 %v1499, %v1503
  %v1508 = vadd.f32 %v1500, %v1504
  %v1509 = vadd.f32 %v1501, %v1505
  %1514 = vrot.lane.b32.xlu0 %v1506, 96
  %v1515 = vpop.permute.xlu0 %1514
  %1516 = vrot.lane.b32.xlu0 %v1507, 96
  %v1517 = vpop.permute.xlu0 %1516
  %1518 = vrot.lane.b32.xlu0 %v1508, 96
  %v1519 = vpop.permute.xlu0 %1518
  %1520 = vrot.lane.b32.xlu0 %v1509, 96
  %v1521 = vpop.permute.xlu0 %1520
  %1526 = vst.msk [vmem:[#allocation4] sm:$0xff] %vm1092, %v1515
  %1527 = vst.msk [vmem:[#allocation4 + $0x8] sm:$0xff] %vm1092, %v1517
  %1528 = vst.msk [vmem:[#allocation4 + $0x10] sm:$0xff] %vm1092, %v1519
  %1529 = vst.msk [vmem:[#allocation4 + $0x18] sm:$0xff] %vm1092, %v1521
  %v1530 = vld [vmem:[#allocation3 + $0x20] sm:$0xff]
  %v1531 = vld [vmem:[#allocation3 + $0x28] sm:$0xff]
  %v1532 = vld [vmem:[#allocation3 + $0x30] sm:$0xff]
  %v1533 = vld [vmem:[#allocation3 + $0x38] sm:$0xff]
  %v1534 = vsel %vm1092, %v1515, 0
  %v1536 = vsel %vm1092, %v1517, 0
  %v1538 = vsel %vm1092, %v1519, 0
  %v1540 = vsel %vm1092, %v1521, 0
  %1542 = vmatprep.subr.mxu0 0.0
  %1543 = vmatpush1.msra.mxu0 0.0
  %1544 = vmatprep.subr.mxu0 0.0
  %1545 = vmatpush1.msra.mxu0 0.0
  %1546 = vmatprep.subr.mxu0 0.0
  %1547 = vmatpush1.msra.mxu0 0.0
  %1548 = vmatprep.subr.mxu0 0.0
  %1549 = vmatpush1.msra.mxu0 0.0
  %1550 = vmatprep.subr.mxu0 0.0
  %1551 = vmatpush1.msra.mxu0 0.0
  %1552 = vmatprep.subr.mxu0 0.0
  %1553 = vmatpush1.msra.mxu0 0.0
  %1554 = vmatprep.subr.mxu0 0.0
  %1555 = vmatpush1.msra.mxu0 0.0
  %1556 = vmatprep.subr.mxu0 0.0
  %1557 = vmatpush1.msra.mxu0 0.0
  %1558 = vmatprep.subr.mxu0 0.0
  %1559 = vmatpush1.msra.mxu0 0.0
  %1560 = vmatprep.subr.mxu0 0.0
  %1561 = vmatpush1.msra.mxu0 0.0
  %1562 = vmatprep.subr.mxu0 0.0
  %1563 = vmatpush1.msra.mxu0 0.0
  %1564 = vmatprep.subr.mxu0 0.0
  %1565 = vmatpush1.msra.mxu0 0.0
  %1566 = vmatprep.subr.mxu0 0.0
  %1567 = vmatpush1.msra.mxu0 %v1306
  %1568 = vmatprep.subr.mxu0 0.0
  %1569 = vmatpush1.msra.mxu0 %v1305
  %1570 = vmatprep.subr.mxu0 0.0
  %1571 = vmatpush1.msra.mxu0 %v1304
  %1572 = vmatprep.subr.mxu0 0.0
  %1573 = vmatpush1.msra.mxu0 %v1303
  %1574 = vmatprep.subr.mxu0 0.0
  %1575 = vmatpush2.msra.mxu0 0.0
  %1576 = vmatprep.subr.mxu0 0.0
  %1577 = vmatpush2.msra.mxu0 0.0
  %1578 = vmatprep.subr.mxu0 0.0
  %1579 = vmatpush2.msra.mxu0 0.0
  %1580 = vmatprep.subr.mxu0 0.0
  %1581 = vmatpush2.msra.mxu0 0.0
  %1582 = vmatprep.subr.mxu0 0.0
  %1583 = vmatpush2.msra.mxu0 0.0
  %1584 = vmatprep.subr.mxu0 0.0
  %1585 = vmatpush2.msra.mxu0 0.0
  %1586 = vmatprep.subr.mxu0 0.0
  %1587 = vmatpush2.msra.mxu0 0.0
  %1588 = vmatprep.subr.mxu0 0.0
  %1589 = vmatpush2.msra.mxu0 0.0
  %1590 = vmatprep.subr.mxu0 0.0
  %1591 = vmatpush2.msra.mxu0 0.0
  %1592 = vmatprep.subr.mxu0 0.0
  %1593 = vmatpush2.msra.mxu0 0.0
  %1594 = vmatprep.subr.mxu0 0.0
  %1595 = vmatpush2.msra.mxu0 0.0
  %1596 = vmatprep.subr.mxu0 0.0
  %1597 = vmatpush2.msra.mxu0 0.0
  %1598 = vmatprep.subr.mxu0 0.0
  %1599 = vmatpush2.msra.mxu0 0.0
  %1600 = vmatprep.subr.mxu0 0.0
  %1601 = vmatpush2.msra.mxu0 0.0
  %1602 = vmatprep.subr.mxu0 0.0
  %1603 = vmatpush2.msra.mxu0 0.0
  %1604 = vmatprep.subr.mxu0 0.0
  %1605 = vmatpush2.msra.mxu0 0.0
  %1606 = vmatprep.mubr.f32.mxu0 0.0
  %1607 = vmatmul.mubr.f32.gmra.mxu0 %v1534
  %v1608 = vpop.f32.mrf.mxu0
  %v1609 = vadd.f32 %v1316, %v1608
  %v1610 = vpop.f32.mrf.mxu0
  %1611 = vmatprep.mubr.f32.mxu0 0.0
  %1612 = vmatmul.mubr.f32.gmra.mxu0 %v1536
  %v1613 = vpop.f32.mrf.mxu0
  %v1614 = vadd.f32 %v1316, %v1613
  %v1615 = vpop.f32.mrf.mxu0
  %1616 = vmatprep.mubr.f32.mxu0 0.0
  %1617 = vmatmul.mubr.f32.gmra.mxu0 %v1538
  %v1618 = vpop.f32.mrf.mxu0
  %v1619 = vadd.f32 %v1316, %v1618
  %v1620 = vpop.f32.mrf.mxu0
  %1621 = vmatprep.mubr.f32.mxu0 0.0
  %1622 = vmatmul.mubr.f32.gmra.mxu0 %v1540
  %v1623 = vpop.f32.mrf.mxu0
  %v1624 = vadd.f32 %v1316, %v1623
  %v1625 = vpop.f32.mrf.mxu0
  %1626 = vdwg.mxu0
  %v1627 = vadd.f32 %v1530, %v1609
  %v1628 = vadd.f32 %v1531, %v1614
  %v1629 = vadd.f32 %v1532, %v1619
  %v1630 = vadd.f32 %v1533, %v1624
  %v1631 = vxor.u32 %v1627, 2147483648
  %v1632 = vxor.u32 %v1628, 2147483648
  %v1633 = vxor.u32 %v1629, 2147483648
  %v1634 = vxor.u32 %v1630, 2147483648
  %v1635 = vmul.f32 %v1631, 1.442695
  %v1636 = vpow.pop %v1635
  %v1637 = vmul.f32 %v1632, 1.442695
  %v1638 = vpow.pop %v1637
  %v1639 = vmul.f32 %v1633, 1.442695
  %v1640 = vpow.pop %v1639
  %v1641 = vmul.f32 %v1634, 1.442695
  %v1642 = vpow.pop %v1641
  %v1643 = vadd.f32 %v1636, 1.0
  %v1644 = vadd.f32 %v1638, 1.0
  %v1645 = vadd.f32 %v1640, 1.0
  %v1646 = vadd.f32 %v1642, 1.0
  %v1647 = vrcp.pop %v1643
  %v1648 = vmul.f32 1.0, %v1647
  %v1649 = vrcp.pop %v1644
  %v1650 = vmul.f32 1.0, %v1649
  %v1651 = vrcp.pop %v1645
  %v1652 = vmul.f32 1.0, %v1651
  %v1653 = vrcp.pop %v1646
  %v1654 = vmul.f32 1.0, %v1653
  %1659 = vrot.lane.b32.xlu0 %v1609, 64
  %v1660 = vpop.permute.xlu0 %1659
  %1661 = vrot.lane.b32.xlu0 %v1614, 64
  %v1662 = vpop.permute.xlu0 %1661
  %1663 = vrot.lane.b32.xlu0 %v1619, 64
  %v1664 = vpop.permute.xlu0 %1663
  %1665 = vrot.lane.b32.xlu0 %v1624, 64
  %v1666 = vpop.permute.xlu0 %1665
  %v1671 = vmul.f32 %v1648, %v1660
  %v1672 = vmul.f32 %v1650, %v1662
  %v1673 = vmul.f32 %v1652, %v1664
  %v1674 = vmul.f32 %v1654, %v1666
  %1679 = vrot.lane.b32.xlu0 %v1671, 64
  %v1680 = vpop.permute.xlu0 %1679
  %1681 = vrot.lane.b32.xlu0 %v1672, 64
  %v1682 = vpop.permute.xlu0 %1681
  %1683 = vrot.lane.b32.xlu0 %v1673, 64
  %v1684 = vpop.permute.xlu0 %1683
  %1685 = vrot.lane.b32.xlu0 %v1674, 64
  %v1686 = vpop.permute.xlu0 %1685
  %v1691 = vadd.f32 %v1530, %v1680
  %v1692 = vadd.f32 %v1531, %v1682
  %v1693 = vadd.f32 %v1532, %v1684
  %v1694 = vadd.f32 %v1533, %v1686
  %v1695 = vtanh.pop %v1691
  %v1696 = vtanh.pop %v1692
  %v1697 = vtanh.pop %v1693
  %v1698 = vtanh.pop %v1694
  %v1699 = vsub.f32 1.0, %v1648
  %v1700 = vsub.f32 1.0, %v1650
  %v1701 = vsub.f32 1.0, %v1652
  %v1702 = vsub.f32 1.0, %v1654
  %1707 = vrot.lane.b32.xlu0 %v1695, 96
  %v1708 = vpop.permute.xlu0 %1707
  %1709 = vrot.lane.b32.xlu0 %v1696, 96
  %v1710 = vpop.permute.xlu0 %1709
  %1711 = vrot.lane.b32.xlu0 %v1697, 96
  %v1712 = vpop.permute.xlu0 %1711
  %1713 = vrot.lane.b32.xlu0 %v1698, 96
  %v1714 = vpop.permute.xlu0 %1713
  %v1719 = vmul.f32 %v1699, %v1708
  %v1720 = vmul.f32 %v1700, %v1710
  %v1721 = vmul.f32 %v1701, %v1712
  %v1722 = vmul.f32 %v1702, %v1714
  %v1723 = vmul.f32 %v1648, %v1506
  %v1724 = vmul.f32 %v1650, %v1507
  %v1725 = vmul.f32 %v1652, %v1508
  %v1726 = vmul.f32 %v1654, %v1509
  %v1727 = vadd.f32 %v1719, %v1723
  %v1728 = vadd.f32 %v1720, %v1724
  %v1729 = vadd.f32 %v1721, %v1725
  %v1730 = vadd.f32 %v1722, %v1726
  %1735 = vrot.lane.b32.xlu0 %v1727, 96
  %v1736 = vpop.permute.xlu0 %1735
  %1737 = vrot.lane.b32.xlu0 %v1728, 96
  %v1738 = vpop.permute.xlu0 %1737
  %1739 = vrot.lane.b32.xlu0 %v1729, 96
  %v1740 = vpop.permute.xlu0 %1739
  %1741 = vrot.lane.b32.xlu0 %v1730, 96
  %v1742 = vpop.permute.xlu0 %1741
  %1747 = vst.msk [vmem:[#allocation4 + $0x20] sm:$0xff] %vm1092, %v1736
  %1748 = vst.msk [vmem:[#allocation4 + $0x28] sm:$0xff] %vm1092, %v1738
  %1749 = vst.msk [vmem:[#allocation4 + $0x30] sm:$0xff] %vm1092, %v1740
  %1750 = vst.msk [vmem:[#allocation4 + $0x38] sm:$0xff] %vm1092, %v1742
  %v1751 = vld [vmem:[#allocation3 + $0x40] sm:$0xff]
  %v1752 = vld [vmem:[#allocation3 + $0x48] sm:$0xff]
  %v1753 = vld [vmem:[#allocation3 + $0x50] sm:$0xff]
  %v1754 = vld [vmem:[#allocation3 + $0x58] sm:$0xff]
  %v1755 = vsel %vm1092, %v1736, 0
  %v1757 = vsel %vm1092, %v1738, 0
  %v1759 = vsel %vm1092, %v1740, 0
  %v1761 = vsel %vm1092, %v1742, 0
  %1763 = vmatprep.subr.mxu0 0.0
  %1764 = vmatpush1.msra.mxu0 0.0
  %1765 = vmatprep.subr.mxu0 0.0
  %1766 = vmatpush1.msra.mxu0 0.0
  %1767 = vmatprep.subr.mxu0 0.0
  %1768 = vmatpush1.msra.mxu0 0.0
  %1769 = vmatprep.subr.mxu0 0.0
  %1770 = vmatpush1.msra.mxu0 0.0
  %1771 = vmatprep.subr.mxu0 0.0
  %1772 = vmatpush1.msra.mxu0 0.0
  %1773 = vmatprep.subr.mxu0 0.0
  %1774 = vmatpush1.msra.mxu0 0.0
  %1775 = vmatprep.subr.mxu0 0.0
  %1776 = vmatpush1.msra.mxu0 0.0
  %1777 = vmatprep.subr.mxu0 0.0
  %1778 = vmatpush1.msra.mxu0 0.0
  %1779 = vmatprep.subr.mxu0 0.0
  %1780 = vmatpush1.msra.mxu0 0.0
  %1781 = vmatprep.subr.mxu0 0.0
  %1782 = vmatpush1.msra.mxu0 0.0
  %1783 = vmatprep.subr.mxu0 0.0
  %1784 = vmatpush1.msra.mxu0 0.0
  %1785 = vmatprep.subr.mxu0 0.0
  %1786 = vmatpush1.msra.mxu0 0.0
  %1787 = vmatprep.subr.mxu0 0.0
  %1788 = vmatpush1.msra.mxu0 %v1306
  %1789 = vmatprep.subr.mxu0 0.0
  %1790 = vmatpush1.msra.mxu0 %v1305
  %1791 = vmatprep.subr.mxu0 0.0
  %1792 = vmatpush1.msra.mxu0 %v1304
  %1793 = vmatprep.subr.mxu0 0.0
  %1794 = vmatpush1.msra.mxu0 %v1303
  %1795 = vmatprep.subr.mxu0 0.0
  %1796 = vmatpush2.msra.mxu0 0.0
  %1797 = vmatprep.subr.mxu0 0.0
  %1798 = vmatpush2.msra.mxu0 0.0
  %1799 = vmatprep.subr.mxu0 0.0
  %1800 = vmatpush2.msra.mxu0 0.0
  %1801 = vmatprep.subr.mxu0 0.0
  %1802 = vmatpush2.msra.mxu0 0.0
  %1803 = vmatprep.subr.mxu0 0.0
  %1804 = vmatpush2.msra.mxu0 0.0
  %1805 = vmatprep.subr.mxu0 0.0
  %1806 = vmatpush2.msra.mxu0 0.0
  %1807 = vmatprep.subr.mxu0 0.0
  %1808 = vmatpush2.msra.mxu0 0.0
  %1809 = vmatprep.subr.mxu0 0.0
  %1810 = vmatpush2.msra.mxu0 0.0
  %1811 = vmatprep.subr.mxu0 0.0
  %1812 = vmatpush2.msra.mxu0 0.0
  %1813 = vmatprep.subr.mxu0 0.0
  %1814 = vmatpush2.msra.mxu0 0.0
  %1815 = vmatprep.subr.mxu0 0.0
  %1816 = vmatpush2.msra.mxu0 0.0
  %1817 = vmatprep.subr.mxu0 0.0
  %1818 = vmatpush2.msra.mxu0 0.0
  %1819 = vmatprep.subr.mxu0 0.0
  %1820 = vmatpush2.msra.mxu0 0.0
  %1821 = vmatprep.subr.mxu0 0.0
  %1822 = vmatpush2.msra.mxu0 0.0
  %1823 = vmatprep.subr.mxu0 0.0
  %1824 = vmatpush2.msra.mxu0 0.0
  %1825 = vmatprep.subr.mxu0 0.0
  %1826 = vmatpush2.msra.mxu0 0.0
  %1827 = vmatprep.mubr.f32.mxu0 0.0
  %1828 = vmatmul.mubr.f32.gmra.mxu0 %v1755
  %v1829 = vpop.f32.mrf.mxu0
  %v1830 = vadd.f32 %v1316, %v1829
  %v1831 = vpop.f32.mrf.mxu0
  %1832 = vmatprep.mubr.f32.mxu0 0.0
  %1833 = vmatmul.mubr.f32.gmra.mxu0 %v1757
  %v1834 = vpop.f32.mrf.mxu0
  %v1835 = vadd.f32 %v1316, %v1834
  %v1836 = vpop.f32.mrf.mxu0
  %1837 = vmatprep.mubr.f32.mxu0 0.0
  %1838 = vmatmul.mubr.f32.gmra.mxu0 %v1759
  %v1839 = vpop.f32.mrf.mxu0
  %v1840 = vadd.f32 %v1316, %v1839
  %v1841 = vpop.f32.mrf.mxu0
  %1842 = vmatprep.mubr.f32.mxu0 0.0
  %1843 = vmatmul.mubr.f32.gmra.mxu0 %v1761
  %v1844 = vpop.f32.mrf.mxu0
  %v1845 = vadd.f32 %v1316, %v1844
  %v1846 = vpop.f32.mrf.mxu0
  %1847 = vdwg.mxu0
  %v1848 = vadd.f32 %v1751, %v1830
  %v1849 = vadd.f32 %v1752, %v1835
  %v1850 = vadd.f32 %v1753, %v1840
  %v1851 = vadd.f32 %v1754, %v1845
  %v1852 = vxor.u32 %v1848, 2147483648
  %v1853 = vxor.u32 %v1849, 2147483648
  %v1854 = vxor.u32 %v1850, 2147483648
  %v1855 = vxor.u32 %v1851, 2147483648
  %v1856 = vmul.f32 %v1852, 1.442695
  %v1857 = vpow.pop %v1856
  %v1858 = vmul.f32 %v1853, 1.442695
  %v1859 = vpow.pop %v1858
  %v1860 = vmul.f32 %v1854, 1.442695
  %v1861 = vpow.pop %v1860
  %v1862 = vmul.f32 %v1855, 1.442695
  %v1863 = vpow.pop %v1862
  %v1864 = vadd.f32 %v1857, 1.0
  %v1865 = vadd.f32 %v1859, 1.0
  %v1866 = vadd.f32 %v1861, 1.0
  %v1867 = vadd.f32 %v1863, 1.0
  %v1868 = vrcp.pop %v1864
  %v1869 = vmul.f32 1.0, %v1868
  %v1870 = vrcp.pop %v1865
  %v1871 = vmul.f32 1.0, %v1870
  %v1872 = vrcp.pop %v1866
  %v1873 = vmul.f32 1.0, %v1872
  %v1874 = vrcp.pop %v1867
  %v1875 = vmul.f32 1.0, %v1874
  %1880 = vrot.lane.b32.xlu0 %v1830, 64
  %v1881 = vpop.permute.xlu0 %1880
  %1882 = vrot.lane.b32.xlu0 %v1835, 64
  %v1883 = vpop.permute.xlu0 %1882
  %1884 = vrot.lane.b32.xlu0 %v1840, 64
  %v1885 = vpop.permute.xlu0 %1884
  %1886 = vrot.lane.b32.xlu0 %v1845, 64
  %v1887 = vpop.permute.xlu0 %1886
  %v1892 = vmul.f32 %v1869, %v1881
  %v1893 = vmul.f32 %v1871, %v1883
  %v1894 = vmul.f32 %v1873, %v1885
  %v1895 = vmul.f32 %v1875, %v1887
  %1900 = vrot.lane.b32.xlu0 %v1892, 64
  %v1901 = vpop.permute.xlu0 %1900
  %1902 = vrot.lane.b32.xlu0 %v1893, 64
  %v1903 = vpop.permute.xlu0 %1902
  %1904 = vrot.lane.b32.xlu0 %v1894, 64
  %v1905 = vpop.permute.xlu0 %1904
  %1906 = vrot.lane.b32.xlu0 %v1895, 64
  %v1907 = vpop.permute.xlu0 %1906
  %v1912 = vadd.f32 %v1751, %v1901
  %v1913 = vadd.f32 %v1752, %v1903
  %v1914 = vadd.f32 %v1753, %v1905
  %v1915 = vadd.f32 %v1754, %v1907
  %v1916 = vtanh.pop %v1912
  %v1917 = vtanh.pop %v1913
  %v1918 = vtanh.pop %v1914
  %v1919 = vtanh.pop %v1915
  %v1920 = vsub.f32 1.0, %v1869
  %v1921 = vsub.f32 1.0, %v1871
  %v1922 = vsub.f32 1.0, %v1873
  %v1923 = vsub.f32 1.0, %v1875
  %1928 = vrot.lane.b32.xlu0 %v1916, 96
  %v1929 = vpop.permute.xlu0 %1928
  %1930 = vrot.lane.b32.xlu0 %v1917, 96
  %v1931 = vpop.permute.xlu0 %1930
  %1932 = vrot.lane.b32.xlu0 %v1918, 96
  %v1933 = vpop.permute.xlu0 %1932
  %1934 = vrot.lane.b32.xlu0 %v1919, 96
  %v1935 = vpop.permute.xlu0 %1934
  %v1940 = vmul.f32 %v1920, %v1929
  %v1941 = vmul.f32 %v1921, %v1931
  %v1942 = vmul.f32 %v1922, %v1933
  %v1943 = vmul.f32 %v1923, %v1935
  %v1944 = vmul.f32 %v1869, %v1727
  %v1945 = vmul.f32 %v1871, %v1728
  %v1946 = vmul.f32 %v1873, %v1729
  %v1947 = vmul.f32 %v1875, %v1730
  %v1948 = vadd.f32 %v1940, %v1944
  %v1949 = vadd.f32 %v1941, %v1945
  %v1950 = vadd.f32 %v1942, %v1946
  %v1951 = vadd.f32 %v1943, %v1947
  %1956 = vrot.lane.b32.xlu0 %v1948, 96
  %v1957 = vpop.permute.xlu0 %1956
  %1958 = vrot.lane.b32.xlu0 %v1949, 96
  %v1959 = vpop.permute.xlu0 %1958
  %1960 = vrot.lane.b32.xlu0 %v1950, 96
  %v1961 = vpop.permute.xlu0 %1960
  %1962 = vrot.lane.b32.xlu0 %v1951, 96
  %v1963 = vpop.permute.xlu0 %1962
  %1968 = vst.msk [vmem:[#allocation4 + $0x40] sm:$0xff] %vm1092, %v1957
  %1969 = vst.msk [vmem:[#allocation4 + $0x48] sm:$0xff] %vm1092, %v1959
  %1970 = vst.msk [vmem:[#allocation4 + $0x50] sm:$0xff] %vm1092, %v1961
  %1971 = vst.msk [vmem:[#allocation4 + $0x58] sm:$0xff] %vm1092, %v1963
  %v1972 = vld [vmem:[#allocation3 + $0x60] sm:$0xff]
  %v1973 = vld [vmem:[#allocation3 + $0x68] sm:$0xff]
  %v1974 = vld [vmem:[#allocation3 + $0x70] sm:$0xff]
  %v1975 = vld [vmem:[#allocation3 + $0x78] sm:$0xff]
  %v1976 = vsel %vm1092, %v1957, 0
  %v1978 = vsel %vm1092, %v1959, 0
  %v1980 = vsel %vm1092, %v1961, 0
  %v1982 = vsel %vm1092, %v1963, 0
  %1984 = vmatprep.subr.mxu0 0.0
  %1985 = vmatpush1.msra.mxu0 0.0
  %1986 = vmatprep.subr.mxu0 0.0
  %1987 = vmatpush1.msra.mxu0 0.0
  %1988 = vmatprep.subr.mxu0 0.0
  %1989 = vmatpush1.msra.mxu0 0.0
  %1990 = vmatprep.subr.mxu0 0.0
  %1991 = vmatpush1.msra.mxu0 0.0
  %1992 = vmatprep.subr.mxu0 0.0
  %1993 = vmatpush1.msra.mxu0 0.0
  %1994 = vmatprep.subr.mxu0 0.0
  %1995 = vmatpush1.msra.mxu0 0.0
  %1996 = vmatprep.subr.mxu0 0.0
  %1997 = vmatpush1.msra.mxu0 0.0
  %1998 = vmatprep.subr.mxu0 0.0
  %1999 = vmatpush1.msra.mxu0 0.0
  %2000 = vmatprep.subr.mxu0 0.0
  %2001 = vmatpush1.msra.mxu0 0.0
  %2002 = vmatprep.subr.mxu0 0.0
  %2003 = vmatpush1.msra.mxu0 0.0
  %2004 = vmatprep.subr.mxu0 0.0
  %2005 = vmatpush1.msra.mxu0 0.0
  %2006 = vmatprep.subr.mxu0 0.0
  %2007 = vmatpush1.msra.mxu0 0.0
  %2008 = vmatprep.subr.mxu0 0.0
  %2009 = vmatpush1.msra.mxu0 %v1306
  %2010 = vmatprep.subr.mxu0 0.0
  %2011 = vmatpush1.msra.mxu0 %v1305
  %2012 = vmatprep.subr.mxu0 0.0
  %2013 = vmatpush1.msra.mxu0 %v1304
  %2014 = vmatprep.subr.mxu0 0.0
  %2015 = vmatpush1.msra.mxu0 %v1303
  %2016 = vmatprep.subr.mxu0 0.0
  %2017 = vmatpush2.msra.mxu0 0.0
  %2018 = vmatprep.subr.mxu0 0.0
  %2019 = vmatpush2.msra.mxu0 0.0
  %2020 = vmatprep.subr.mxu0 0.0
  %2021 = vmatpush2.msra.mxu0 0.0
  %2022 = vmatprep.subr.mxu0 0.0
  %2023 = vmatpush2.msra.mxu0 0.0
  %2024 = vmatprep.subr.mxu0 0.0
  %2025 = vmatpush2.msra.mxu0 0.0
  %2026 = vmatprep.subr.mxu0 0.0
  %2027 = vmatpush2.msra.mxu0 0.0
  %2028 = vmatprep.subr.mxu0 0.0
  %2029 = vmatpush2.msra.mxu0 0.0
  %2030 = vmatprep.subr.mxu0 0.0
  %2031 = vmatpush2.msra.mxu0 0.0
  %2032 = vmatprep.subr.mxu0 0.0
  %2033 = vmatpush2.msra.mxu0 0.0
  %2034 = vmatprep.subr.mxu0 0.0
  %2035 = vmatpush2.msra.mxu0 0.0
  %2036 = vmatprep.subr.mxu0 0.0
  %2037 = vmatpush2.msra.mxu0 0.0
  %2038 = vmatprep.subr.mxu0 0.0
  %2039 = vmatpush2.msra.mxu0 0.0
  %2040 = vmatprep.subr.mxu0 0.0
  %2041 = vmatpush2.msra.mxu0 0.0
  %2042 = vmatprep.subr.mxu0 0.0
  %2043 = vmatpush2.msra.mxu0 0.0
  %2044 = vmatprep.subr.mxu0 0.0
  %2045 = vmatpush2.msra.mxu0 0.0
  %2046 = vmatprep.subr.mxu0 0.0
  %2047 = vmatpush2.msra.mxu0 0.0
  %2048 = vmatprep.mubr.f32.mxu0 0.0
  %2049 = vmatmul.mubr.f32.gmra.mxu0 %v1976
  %v2050 = vpop.f32.mrf.mxu0
  %v2051 = vadd.f32 %v1316, %v2050
  %v2052 = vpop.f32.mrf.mxu0
  %2053 = vmatprep.mubr.f32.mxu0 0.0
  %2054 = vmatmul.mubr.f32.gmra.mxu0 %v1978
  %v2055 = vpop.f32.mrf.mxu0
  %v2056 = vadd.f32 %v1316, %v2055
  %v2057 = vpop.f32.mrf.mxu0
  %2058 = vmatprep.mubr.f32.mxu0 0.0
  %2059 = vmatmul.mubr.f32.gmra.mxu0 %v1980
  %v2060 = vpop.f32.mrf.mxu0
  %v2061 = vadd.f32 %v1316, %v2060
  %v2062 = vpop.f32.mrf.mxu0
  %2063 = vmatprep.mubr.f32.mxu0 0.0
  %2064 = vmatmul.mubr.f32.gmra.mxu0 %v1982
  %v2065 = vpop.f32.mrf.mxu0
  %v2066 = vadd.f32 %v1316, %v2065
  %v2067 = vpop.f32.mrf.mxu0
  %2068 = vdwg.mxu0
  %v2069 = vadd.f32 %v1972, %v2051
  %v2070 = vadd.f32 %v1973, %v2056
  %v2071 = vadd.f32 %v1974, %v2061
  %v2072 = vadd.f32 %v1975, %v2066
  %v2073 = vxor.u32 %v2069, 2147483648
  %v2074 = vxor.u32 %v2070, 2147483648
  %v2075 = vxor.u32 %v2071, 2147483648
  %v2076 = vxor.u32 %v2072, 2147483648
  %v2077 = vmul.f32 %v2073, 1.442695
  %v2078 = vpow.pop %v2077
  %v2079 = vmul.f32 %v2074, 1.442695
  %v2080 = vpow.pop %v2079
  %v2081 = vmul.f32 %v2075, 1.442695
  %v2082 = vpow.pop %v2081
  %v2083 = vmul.f32 %v2076, 1.442695
  %v2084 = vpow.pop %v2083
  %v2085 = vadd.f32 %v2078, 1.0
  %v2086 = vadd.f32 %v2080, 1.0
  %v2087 = vadd.f32 %v2082, 1.0
  %v2088 = vadd.f32 %v2084, 1.0
  %v2089 = vrcp.pop %v2085
  %v2090 = vmul.f32 1.0, %v2089
  %v2091 = vrcp.pop %v2086
  %v2092 = vmul.f32 1.0, %v2091
  %v2093 = vrcp.pop %v2087
  %v2094 = vmul.f32 1.0, %v2093
  %v2095 = vrcp.pop %v2088
  %v2096 = vmul.f32 1.0, %v2095
  %2101 = vrot.lane.b32.xlu0 %v2051, 64
  %v2102 = vpop.permute.xlu0 %2101
  %2103 = vrot.lane.b32.xlu0 %v2056, 64
  %v2104 = vpop.permute.xlu0 %2103
  %2105 = vrot.lane.b32.xlu0 %v2061, 64
  %v2106 = vpop.permute.xlu0 %2105
  %2107 = vrot.lane.b32.xlu0 %v2066, 64
  %v2108 = vpop.permute.xlu0 %2107
  %v2113 = vmul.f32 %v2090, %v2102
  %v2114 = vmul.f32 %v2092, %v2104
  %v2115 = vmul.f32 %v2094, %v2106
  %v2116 = vmul.f32 %v2096, %v2108
  %2121 = vrot.lane.b32.xlu0 %v2113, 64
  %v2122 = vpop.permute.xlu0 %2121
  %2123 = vrot.lane.b32.xlu0 %v2114, 64
  %v2124 = vpop.permute.xlu0 %2123
  %2125 = vrot.lane.b32.xlu0 %v2115, 64
  %v2126 = vpop.permute.xlu0 %2125
  %2127 = vrot.lane.b32.xlu0 %v2116, 64
  %v2128 = vpop.permute.xlu0 %2127
  %v2133 = vadd.f32 %v1972, %v2122
  %v2134 = vadd.f32 %v1973, %v2124
  %v2135 = vadd.f32 %v1974, %v2126
  %v2136 = vadd.f32 %v1975, %v2128
  %v2137 = vtanh.pop %v2133
  %v2138 = vtanh.pop %v2134
  %v2139 = vtanh.pop %v2135
  %v2140 = vtanh.pop %v2136
  %v2141 = vsub.f32 1.0, %v2090
  %v2142 = vsub.f32 1.0, %v2092
  %v2143 = vsub.f32 1.0, %v2094
  %v2144 = vsub.f32 1.0, %v2096
  %2149 = vrot.lane.b32.xlu0 %v2137, 96
  %v2150 = vpop.permute.xlu0 %2149
  %2151 = vrot.lane.b32.xlu0 %v2138, 96
  %v2152 = vpop.permute.xlu0 %2151
  %2153 = vrot.lane.b32.xlu0 %v2139, 96
  %v2154 = vpop.permute.xlu0 %2153
  %2155 = vrot.lane.b32.xlu0 %v2140, 96
  %v2156 = vpop.permute.xlu0 %2155
  %v2161 = vmul.f32 %v2141, %v2150
  %v2162 = vmul.f32 %v2142, %v2152
  %v2163 = vmul.f32 %v2143, %v2154
  %v2164 = vmul.f32 %v2144, %v2156
  %v2165 = vmul.f32 %v2090, %v1948
  %v2166 = vmul.f32 %v2092, %v1949
  %v2167 = vmul.f32 %v2094, %v1950
  %v2168 = vmul.f32 %v2096, %v1951
  %v2169 = vadd.f32 %v2161, %v2165
  %v2170 = vadd.f32 %v2162, %v2166
  %v2171 = vadd.f32 %v2163, %v2167
  %v2172 = vadd.f32 %v2164, %v2168
  %2177 = vrot.lane.b32.xlu0 %v2169, 96
  %v2178 = vpop.permute.xlu0 %2177
  %2179 = vrot.lane.b32.xlu0 %v2170, 96
  %v2180 = vpop.permute.xlu0 %2179
  %2181 = vrot.lane.b32.xlu0 %v2171, 96
  %v2182 = vpop.permute.xlu0 %2181
  %2183 = vrot.lane.b32.xlu0 %v2172, 96
  %v2184 = vpop.permute.xlu0 %2183
  %2189 = vst.msk [vmem:[#allocation4 + $0x60] sm:$0xff] %vm1092, %v2178
  %2190 = vst.msk [vmem:[#allocation4 + $0x68] sm:$0xff] %vm1092, %v2180
  %2191 = vst.msk [vmem:[#allocation4 + $0x70] sm:$0xff] %vm1092, %v2182
  %2192 = vst.msk [vmem:[#allocation4 + $0x78] sm:$0xff] %vm1092, %v2184
  %v2193 = vld [vmem:[#allocation4] sm:$0xff]
  %v2194 = vld [vmem:[#allocation4 + $0x8] sm:$0xff]
  %v2195 = vld [vmem:[#allocation4 + $0x10] sm:$0xff]
  %v2196 = vld [vmem:[#allocation4 + $0x18] sm:$0xff]
  %v2197 = vld [vmem:[#allocation4 + $0x20] sm:$0xff]
  %v2198 = vld [vmem:[#allocation4 + $0x28] sm:$0xff]
  %v2199 = vld [vmem:[#allocation4 + $0x30] sm:$0xff]
  %v2200 = vld [vmem:[#allocation4 + $0x38] sm:$0xff]
  %v2201 = vld [vmem:[#allocation4 + $0x40] sm:$0xff]
  %v2202 = vld [vmem:[#allocation4 + $0x48] sm:$0xff]
  %v2203 = vld [vmem:[#allocation4 + $0x50] sm:$0xff]
  %v2204 = vld [vmem:[#allocation4 + $0x58] sm:$0xff]
  %v2205 = vld [vmem:[#allocation4 + $0x60] sm:$0xff]
  %v2206 = vld [vmem:[#allocation4 + $0x68] sm:$0xff]
  %v2207 = vld [vmem:[#allocation4 + $0x70] sm:$0xff]
  %v2208 = vld [vmem:[#allocation4 + $0x78] sm:$0xff]
  %2209 = vxpose.xlu0.b32.start [1/16] %v2193, 128
  %2210 = vxpose.xlu0.b32.cont [2/16] %v2194, 128
  %2211 = vxpose.xlu0.b32.cont [3/16] %v2195, 128
  %2212 = vxpose.xlu0.b32.cont [4/16] %v2196, 128
  %2213 = vxpose.xlu0.b32.cont [5/16] %v2197, 128
  %2214 = vxpose.xlu0.b32.cont [6/16] %v2198, 128
  %2215 = vxpose.xlu0.b32.cont [7/16] %v2199, 128
  %2216 = vxpose.xlu0.b32.cont [8/16] %v2200, 128
  %2217 = vxpose.xlu0.b32.cont [9/16] %v2201, 128
  %2218 = vxpose.xlu0.b32.cont [10/16] %v2202, 128
  %2219 = vxpose.xlu0.b32.cont [11/16] %v2203, 128
  %2220 = vxpose.xlu0.b32.cont [12/16] %v2204, 128
  %2221 = vxpose.xlu0.b32.cont [13/16] %v2205, 128
  %2222 = vxpose.xlu0.b32.cont [14/16] %v2206, 128
  %2223 = vxpose.xlu0.b32.cont [15/16] %v2207, 128
  %2224 = vxpose.xlu0.b32.end [16/16] %v2208, 128
  %v2225 = vpop.trf.xlu0
  %v2226 = vpop.trf.xlu0
  %v2227 = vpop.trf.xlu0
  %v2228 = vpop.trf.xlu0
  %v2229 = vpop.trf.xlu0
  %v2230 = vpop.trf.xlu0
  %v2231 = vpop.trf.xlu0
  %v2232 = vpop.trf.xlu0
  %v2233 = vpop.trf.xlu0
  %v2234 = vpop.trf.xlu0
  %v2235 = vpop.trf.xlu0
  %v2236 = vpop.trf.xlu0
  %v2237 = vpop.trf.xlu0
  %v2238 = vpop.trf.xlu0
  %v2239 = vpop.trf.xlu0
  %v2240 = vpop.trf.xlu0
  %2241 = vst [vmem:[%s13] sm:$0xff] %v2225
  %2242 = vst [vmem:[%s13 + $0x8] sm:$0xff] %v2226
  %2243 = vst [vmem:[%s13 + $0x10] sm:$0xff] %v2227
  %2244 = vst [vmem:[%s13 + $0x18] sm:$0xff] %v2228
  %v2245 = vld [vmem:[%s10] sm:$0x3]
  %v2246 = vld [vmem:[%s11] sm:$0x3]
  %2248 = vset.pattern.permute.xlu0 0
  %2249 = vperm.xlu0 %2248, %v2246
  %v2250 = vpop.permute.xlu0 %2249
  %v2253 = vsel %vm1092, %v2245, 0
  %2255 = vmatprep.subr.mxu0 0.0
  %2256 = vmatpush1.msra.mxu0 0.0
  %2257 = vmatprep.subr.mxu0 0.0
  %2258 = vmatpush1.msra.mxu0 0.0
  %2259 = vmatprep.subr.mxu0 0.0
  %2260 = vmatpush1.msra.mxu0 0.0
  %2261 = vmatprep.subr.mxu0 0.0
  %2262 = vmatpush1.msra.mxu0 0.0
  %2263 = vmatprep.subr.mxu0 0.0
  %2264 = vmatpush1.msra.mxu0 0.0
  %2265 = vmatprep.subr.mxu0 0.0
  %2266 = vmatpush1.msra.mxu0 0.0
  %2267 = vmatprep.subr.mxu0 0.0
  %2268 = vmatpush1.msra.mxu0 0.0
  %2269 = vmatprep.subr.mxu0 0.0
  %2270 = vmatpush1.msra.mxu0 0.0
  %2271 = vmatprep.subr.mxu0 0.0
  %2272 = vmatpush1.msra.mxu0 0.0
  %2273 = vmatprep.subr.mxu0 0.0
  %2274 = vmatpush1.msra.mxu0 0.0
  %2275 = vmatprep.subr.mxu0 0.0
  %2276 = vmatpush1.msra.mxu0 0.0
  %2277 = vmatprep.subr.mxu0 0.0
  %2278 = vmatpush1.msra.mxu0 0.0
  %2279 = vmatprep.subr.mxu0 0.0
  %2280 = vmatpush1.msra.mxu0 %v2228
  %2281 = vmatprep.subr.mxu0 0.0
  %2282 = vmatpush1.msra.mxu0 %v2227
  %2283 = vmatprep.subr.mxu0 0.0
  %2284 = vmatpush1.msra.mxu0 %v2226
  %2285 = vmatprep.subr.mxu0 0.0
  %2286 = vmatpush1.msra.mxu0 %v2225
  %2287 = vmatprep.subr.mxu0 0.0
  %2288 = vmatpush2.msra.mxu0 0.0
  %2289 = vmatprep.subr.mxu0 0.0
  %2290 = vmatpush2.msra.mxu0 0.0
  %2291 = vmatprep.subr.mxu0 0.0
  %2292 = vmatpush2.msra.mxu0 0.0
  %2293 = vmatprep.subr.mxu0 0.0
  %2294 = vmatpush2.msra.mxu0 0.0
  %2295 = vmatprep.subr.mxu0 0.0
  %2296 = vmatpush2.msra.mxu0 0.0
  %2297 = vmatprep.subr.mxu0 0.0
  %2298 = vmatpush2.msra.mxu0 0.0
  %2299 = vmatprep.subr.mxu0 0.0
  %2300 = vmatpush2.msra.mxu0 0.0
  %2301 = vmatprep.subr.mxu0 0.0
  %2302 = vmatpush2.msra.mxu0 0.0
  %2303 = vmatprep.subr.mxu0 0.0
  %2304 = vmatpush2.msra.mxu0 0.0
  %2305 = vmatprep.subr.mxu0 0.0
  %2306 = vmatpush2.msra.mxu0 0.0
  %2307 = vmatprep.subr.mxu0 0.0
  %2308 = vmatpush2.msra.mxu0 0.0
  %2309 = vmatprep.subr.mxu0 0.0
  %2310 = vmatpush2.msra.mxu0 0.0
  %2311 = vmatprep.subr.mxu0 0.0
  %2312 = vmatpush2.msra.mxu0 0.0
  %2313 = vmatprep.subr.mxu0 0.0
  %2314 = vmatpush2.msra.mxu0 0.0
  %2315 = vmatprep.subr.mxu0 0.0
  %2316 = vmatpush2.msra.mxu0 0.0
  %2317 = vmatprep.subr.mxu0 0.0
  %2318 = vmatpush2.msra.mxu0 0.0
  %2319 = vmatprep.mubr.f32.mxu0 0.0
  %2320 = vmatmul.mubr.f32.gmra.mxu0 %v2253
  %v2321 = vpop.f32.mrf.mxu0
  %v2322 = vadd.f32 %v2250, %v2321
  %v2323 = vpop.f32.mrf.mxu0
  %2324 = vdwg.mxu0
  %2325 = vst [vmem:[%s12] sm:$0x3] %v2322
  // Predicated region
  $region50: #{_lambda_.1} parent=0 // pred_check
    _
  $region51: #{_lambda_.1} parent=0 // pred_check_branch
    %2327 = sbr.rel (0) target = $region53
  $region52: #{_lambda_.1} parent=0 // pred_region
    _
  $region53: #{_lambda_.1} parent=0 // pred_fallthru
    _
  // Predicated region
  $region54: #{_lambda_.1} parent=0 // pred_check
    _
  $region55: #{_lambda_.1} parent=0 // pred_check_branch
    %2329 = sbr.rel (0) target = $region57
  $region56: #{_lambda_.1} parent=0 // pred_region
    _
  $region57: #{_lambda_.1} parent=0 // pred_fallthru
    _
  // Predicated region
  $region58: #{_lambda_.1} parent=0 // pred_check
    _
  $region59: #{_lambda_.1} parent=0 // pred_check_branch
    %2331 = sbr.rel (0) target = $region61
  $region60: #{_lambda_.1} parent=0 // pred_region
    _
  $region61: #{_lambda_.1} parent=0 // pred_fallthru
    _
  // Predicated region
  $region62: #{_lambda_.1} parent=0 // pred_check
    _
  $region63: #{_lambda_.1} parent=0 // pred_check_branch
    %2333 = sbr.rel (0) target = $region65
  $region64: #{_lambda_.1} parent=0 // pred_region
    _
  $region65: #{_lambda_.1} parent=0 // pred_fallthru
    _

</llo_original>
